<compile_context>
chip_gen: v7x
topology: tpu7x:2x2x1
jax: 0.10.0
libtpu: 0.0.40
codegen_flags: <defaults>
</compile_context>

<pallas_src>
import functools

import jax
import jax.numpy as jnp
from jax.experimental import pallas as pl
from jax.experimental.pallas import tpu as pltpu


# ----------------------------------------------------------------------------
# Fused kernel: 4 x ChebConv(K=2) + lin1 + leaky_relu + lin2 + row select
# ----------------------------------------------------------------------------
def _fused_gnn_kernel(
    lhat_ref,      # (1, L_rows, gn_pad) bf16  L_rows = gn_pad (resident) or tm (streamed)
    x0_ref,        # (1, gn_pad, H)      bf16  padded input features of this group
    w01_ref,       # (1, 2, H, H)        bf16  this layer's (W0, W1)
    bias_ref,      # (1, 1, H)           f32   this layer's bias
    lin1_w_ref,    # (H, H)              bf16
    lin1_b_ref,    # (1, H)              f32
    lin2_wT_ref,   # (1, H)              f32   lin2 weight, transposed
    lin2_b_ref,    # (1, 1)              f32
    out_ref,       # (1, gpg, 1)         f32
    buf_a,         # (gn_pad, H)         bf16  ping activation scratch
    buf_b,         # (gn_pad, H)         bf16  pong activation scratch
    *, tm, num_layers, neg_slope, num_nodes, gpg, lhat_resident,
):
    layer = pl.program_id(1)
    r = pl.program_id(2)
    num_r = pl.num_programs(2)
    row0 = pl.multiple_of(r * tm, tm)

    # L_hat rows for this row tile.  Static branch: resident block is sliced,
    # streamed slab is already exactly (tm, gn_pad).
    if lhat_resident:
        lhat_blk = lhat_ref[0, pl.ds(row0, tm), :]          # (tm, gn_pad) bf16
    else:
        lhat_blk = lhat_ref[0]                              # (tm, gn_pad) bf16

    w0 = w01_ref[0, 0]                                      # (H, H) bf16
    w1 = w01_ref[0, 1]                                      # (H, H) bf16
    bias = bias_ref[0]                                      # (1, H) f32
    # conv4 (last layer) has no activation: fold that into the slope value.
    slope = jnp.where(layer < num_layers - 1, neg_slope, 1.0)

    def cheb_step(read_full, read_rows, dst_ref):
        x_full = read_full()                                            # (gn_pad, H) bf16
        # Graph propagation for this row tile: T1(L_hat) x.
        tx = jnp.dot(lhat_blk, x_full,
                     preferred_element_type=jnp.float32)                # (tm, H) f32
        # Two accumulating MXU dots (review: no concat / no K=2H copy).
        out = jnp.dot(read_rows(), w0, preferred_element_type=jnp.float32)
        out = out + jnp.dot(tx.astype(jnp.bfloat16), w1,
                            preferred_element_type=jnp.float32)
        out = out + bias
        out = jnp.where(out >= 0.0, out, slope * out)                   # leaky_relu / id
        dst_ref[pl.ds(row0, tm), :] = out.astype(jnp.bfloat16)

    # Layer 0 reads the input features directly (review: no staging copy);
    # layers 1..3 ping-pong between the two scratch buffers.
    @pl.when(layer == 0)
    def _():
        cheb_step(lambda: x0_ref[0],
                  lambda: x0_ref[0, pl.ds(row0, tm), :],
                  buf_b)

    @pl.when((layer > 0) & (layer % 2 == 1))
    def _():
        cheb_step(lambda: buf_b[...],
                  lambda: buf_b[pl.ds(row0, tm), :],
                  buf_a)

    @pl.when((layer > 0) & (layer % 2 == 0))
    def _():
        cheb_step(lambda: buf_a[...],
                  lambda: buf_a[pl.ds(row0, tm), :],
                  buf_b)

    # After the last row tile of the last conv layer, run the fused MLP head on
    # the x[::num_nodes] rows of this group only (static strided row gather —
    # the one-hot selection matmul from the previous version is gone).
    @pl.when((layer == num_layers - 1) & (r == num_r - 1))
    def _():
        final_buf = buf_a if (num_layers % 2 == 0) else buf_b           # static pick
        rows = [final_buf[pl.ds(j * num_nodes, 1), :] for j in range(gpg)]
        x_sel = jnp.concatenate(rows, axis=0)                           # (gpg, H) bf16
        h = jnp.dot(x_sel, lin1_w_ref[...],
                    preferred_element_type=jnp.float32) + lin1_b_ref[...]
        h = jnp.where(h >= 0.0, h, neg_slope * h)
        out_ref[0] = (jnp.sum(h * lin2_wT_ref[...], axis=-1, keepdims=True)
                      + lin2_b_ref[...])


# ----------------------------------------------------------------------------
# Planning (static), operand preparation (hoistable), and the pallas_call
# ----------------------------------------------------------------------------
def _round_up(v, m):
    return ((v + m - 1) // m) * m


def _usable_vmem_bytes():
    """~75% of physical VMEM: ~48 MiB on v7x (64 MiB), ~96 MiB on v5e/v6e (128 MiB)."""
    cap = 128 * 1024 * 1024
    try:
        cap = int(pltpu.get_tpu_info().vmem_capacity_bytes)
    except Exception:
        pass
    if cap <= 0:
        cap = 128 * 1024 * 1024
    return (cap * 3) // 4


def plan_forward(n, num_feat, hid, num_nodes, *, row_tile=512,
                 graphs_per_group=None, assume_block_diagonal=True,
                 force_stream_lhat=False):
    """All static decisions: grouping, padding, tiles, residency, VMEM budget."""
    num_graphs = -(-n // num_nodes)              # len(range(0, n, num_nodes))
    # x[::num_nodes] must select rows that exist (review correctness concern).
    assert (num_graphs - 1) * num_nodes < n
    block_diag = bool(assume_block_diagonal and n == num_graphs * num_nodes)

    usable = _usable_vmem_bytes()

    if block_diag:
        if graphs_per_group is None:
            # 2 L_hat buffers * gn_pad^2 * 2 B dominate the resident budget.
            budget_gn = int((usable / 4.0) ** 0.5)
            target_gn = max(128, min(2048, (budget_gn // 128) * 128))
            gpg = 1
            for d in range(1, num_graphs + 1):
                if num_graphs % d == 0 and d * num_nodes <= target_gn:
                    gpg = d
        else:
            gpg = int(graphs_per_group)
            assert num_graphs % gpg == 0, "graphs_per_group must divide num_graphs"
        num_groups = num_graphs // gpg
        gn = gpg * num_nodes
    else:
        gpg = num_graphs
        num_groups = 1
        gn = n

    gn_pad = _round_up(max(gn, 128), 128)        # lane-dense slab (review item 9)

    # Row tile: largest multiple of 128 dividing gn_pad, capped by row_tile.
    tm = 128
    t = 128
    while t <= min(gn_pad, max(int(row_tile), 128)):
        if gn_pad % t == 0:
            tm = t
        t += 128

    bpe = 2  # bf16
    def vmem_est(lhat_rows):
        # Count every pipelined input double-buffered (review item 6).
        return (2 * lhat_rows * gn_pad * bpe        # L_hat blocks
                + 2 * gn_pad * hid * bpe            # x0 blocks
                + 2 * 2 * hid * hid * bpe           # per-layer (W0, W1)
                + 2 * hid * hid * bpe               # lin1_w
                + 2 * gn_pad * hid * bpe            # ping + pong scratch
                + 64 * 1024)                        # biases / lin2 / out / slack

    lhat_resident = (not force_stream_lhat) and vmem_est(gn_pad) <= usable
    est = vmem_est(gn_pad if lhat_resident else tm)
    vmem_limit = int(min(usable, max(int(est * 1.3) + (4 << 20), 32 << 20)))

    return dict(n=n, num_feat=num_feat, hid=hid, num_nodes=num_nodes,
                num_graphs=num_graphs, block_diag=block_diag, gpg=gpg,
                num_groups=num_groups, gn=gn, gn_pad=gn_pad, tm=tm,
                lhat_resident=lhat_resident, vmem_limit=vmem_limit,
                num_layers=4)


def prepare_operands(x, lhat, params, cfg):
    """Pad / group / cast all operands.  Call once and reuse across forward calls
    when lhat and params are static (review item 12)."""
    f = cfg["num_feat"]
    hid = cfg["hid"]
    G = cfg["num_groups"]
    gn = cfg["gn"]
    gn_pad = cfg["gn_pad"]
    nl = cfg["num_layers"]
    bf = jnp.bfloat16

    x = x.astype(jnp.float32)
    lhat = lhat.astype(jnp.float32)

    if cfg["block_diag"]:
        # Diagonal (group) blocks of the scaled Laplacian; off-diagonal blocks of
        # a batched-disjoint-graph Laplacian are zero.
        blocks = lhat.reshape(G, gn, G, gn)[jnp.arange(G), :, jnp.arange(G), :]
        x_g = x.reshape(G, gn, f)
    else:
        blocks = lhat[None]                       # (1, n, n)
        x_g = x[None]                             # (1, n, f)

    lhat_p = jnp.zeros((G, gn_pad, gn_pad), jnp.float32).at[:, :gn, :gn].set(blocks)
    x_p = jnp.zeros((G, gn_pad, hid), jnp.float32).at[:, :gn, :f].set(x_g)

    # Layer-1 weights padded up to hid input features so all layers share shape.
    w0_1 = jnp.zeros((hid, hid), jnp.float32).at[:f, :].set(params["c1_w0"])
    w1_1 = jnp.zeros((hid, hid), jnp.float32).at[:f, :].set(params["c1_w1"])
    per_layer = [(w0_1, w1_1)] + [
        (params[f"c{i}_w0"], params[f"c{i}_w1"]) for i in (2, 3, 4)]
    w_stack = jnp.stack([jnp.stack(p, axis=0) for p in per_layer], axis=0)  # (4,2,H,H)
    biases = jnp.stack(
        [params[f"c{i}_b"] for i in range(1, 5)]).reshape(nl, 1, hid)

    return (lhat_p.astype(bf),
            x_p.astype(bf),
            w_stack.astype(bf),
            biases.astype(jnp.float32),
            params["lin1_w"].astype(bf),
            params["lin1_b"].reshape(1, hid).astype(jnp.float32),
            params["lin2_w"].reshape(1, hid).astype(jnp.float32),
            params["lin2_b"].reshape(1, 1).astype(jnp.float32))


def run_forward(cfg, lhat_p, x_p, w_stack, biases, lin1_w, lin1_b, lin2_wT, lin2_b):
    hid = cfg["hid"]
    gn_pad = cfg["gn_pad"]
    tm = cfg["tm"]
    G = cfg["num_groups"]
    gpg = cfg["gpg"]
    nl = cfg["num_layers"]
    resident = cfg["lhat_resident"]
    bf = jnp.bfloat16

    l_rows = gn_pad if resident else tm
    lhat_idx = (lambda g, l, r: (g, 0, 0)) if resident else (lambda g, l, r: (g, r, 0))

    kernel = functools.partial(
        _fused_gnn_kernel, tm=tm, num_layers=nl, neg_slope=0.1,
        num_nodes=cfg["num_nodes"], gpg=gpg, lhat_resident=resident)

    grid = (G, nl, gn_pad // tm)

    out = pl.pallas_call(
        kernel,
        out_shape=jax.ShapeDtypeStruct((G, gpg, 1), jnp.float32),
        grid_spec=pltpu.PrefetchScalarGridSpec(
            num_scalar_prefetch=0,
            grid=grid,
            in_specs=[
                pl.BlockSpec((1, l_rows, gn_pad), lhat_idx),                 # L_hat block/slab
                pl.BlockSpec((1, gn_pad, hid), lambda g, l, r: (g, 0, 0)),   # x0 (per group)
                pl.BlockSpec((1, 2, hid, hid), lambda g, l, r: (l, 0, 0, 0)),# (W0,W1) per layer
                pl.BlockSpec((1, 1, hid), lambda g, l, r: (l, 0, 0)),        # bias per layer
                pl.BlockSpec((hid, hid), lambda g, l, r: (0, 0)),            # lin1_w
                pl.BlockSpec((1, hid), lambda g, l, r: (0, 0)),              # lin1_b
                pl.BlockSpec((1, hid), lambda g, l, r: (0, 0)),              # lin2_w^T
                pl.BlockSpec((1, 1), lambda g, l, r: (0, 0)),                # lin2_b
            ],
            out_specs=pl.BlockSpec((1, gpg, 1), lambda g, l, r: (g, 0, 0)),
            scratch_shapes=[
                pltpu.VMEM((gn_pad, hid), bf),   # ping activation buffer
                pltpu.VMEM((gn_pad, hid), bf),   # pong activation buffer
            ],
        ),
        compiler_params=pltpu.CompilerParams(
            # Groups are independent -> parallel (v7x megacore); layers / row
            # tiles are sequential and share the per-core scratch -> arbitrary.
            dimension_semantics=("parallel", "arbitrary", "arbitrary"),
            vmem_limit_bytes=cfg["vmem_limit"],
        ),
    )(lhat_p, x_p, w_stack, biases, lin1_w, lin1_b, lin2_wT, lin2_b)

    return out.reshape(cfg["num_graphs"], 1)


def chebconv_gnn_forward(x, lhat, params, *, num_nodes, row_tile=512,
                         graphs_per_group=None, assume_block_diagonal=True,
                         force_stream_lhat=False):
    """Convenience wrapper: plan + prepare + run in one call."""
    n, f = x.shape
    hid = params["c1_w0"].shape[1]
    cfg = plan_forward(n, f, hid, num_nodes, row_tile=row_tile,
                       graphs_per_group=graphs_per_group,
                       assume_block_diagonal=assume_block_diagonal,
                       force_stream_lhat=force_stream_lhat)
    ops = prepare_operands(x, lhat, params, cfg)
    return run_forward(cfg, *ops)


# ----------------------------------------------------------------------------
# Glue: dense scaled Laplacian, parameter init, pure-JAX reference
# ----------------------------------------------------------------------------
def build_lhat(edge_index, num_nodes_total):
    """L_hat = (2/lambda_max)*L - I with lambda_max=2 => -D^{-1/2} A D^{-1/2}."""
    row, col = edge_index[0], edge_index[1]
    adj = jnp.zeros((num_nodes_total, num_nodes_total), jnp.float32)
    adj = adj.at[row, col].add(1.0)
    deg = adj.sum(axis=1)
    dinv = jnp.where(deg > 0.0, 1.0 / jnp.sqrt(deg), 0.0)
    return -(dinv[:, None] * adj * dinv[None, :])


def glorot(key, shape):
    fan_in, fan_out = shape[-2], shape[-1]
    limit = jnp.sqrt(6.0 / (fan_in + fan_out))
    return jax.random.uniform(key, shape, jnp.float32, -limit, limit)


def init_params(key, num_feat, hid):
    keys = jax.random.split(key, 12)
    p = {}
    dims = [(num_feat, hid), (hid, hid), (hid, hid), (hid, hid)]
    for i, (fi, fo) in enumerate(dims, start=1):
        p[f"c{i}_w0"] = glorot(keys[2 * i - 2], (fi, fo))
        p[f"c{i}_w1"] = glorot(keys[2 * i - 1], (fi, fo))
        p[f"c{i}_b"] = jnp.zeros((fo,), jnp.float32)
    p["lin1_w"] = glorot(keys[8], (hid, hid))
    p["lin1_b"] = jax.random.uniform(keys[9], (hid,), jnp.float32, -0.05, 0.05)
    p["lin2_w"] = glorot(keys[10], (hid, 1))
    p["lin2_b"] = jax.random.uniform(keys[11], (1,), jnp.float32, -0.05, 0.05)
    return p


def reference_forward(x, lhat, params, num_nodes):
    """Plain f32 JAX reference (dropout identity in eval mode)."""
    def cheb(h, i):
        return (h @ params[f"c{i}_w0"] + (lhat @ h) @ params[f"c{i}_w1"]
                + params[f"c{i}_b"])
    def lrelu(v):
        return jnp.where(v >= 0.0, v, 0.1 * v)
    h = x
    for i in (1, 2, 3):
        h = lrelu(cheb(h, i))
    h = cheb(h, 4)
    h = lrelu(h @ params["lin1_w"] + params["lin1_b"])
    out = h @ params["lin2_w"] + params["lin2_b"]
    return out[::num_nodes]


def make_ring_edges(num_nodes, num_graphs):
    rows, cols = [], []
    for g in range(num_graphs):
        off = g * num_nodes
        src = jnp.arange(num_nodes) + off
        dst = (jnp.arange(num_nodes) + 1) % num_nodes + off
        rows.append(jnp.concatenate([src, dst]))
        cols.append(jnp.concatenate([dst, src]))
    return jnp.stack([jnp.concatenate(rows), jnp.concatenate(cols)],
                     axis=0).astype(jnp.int32)


# ----------------------------------------------------------------------------
# Example run
# ----------------------------------------------------------------------------
if __name__ == "__main__":
    num_feat = 4
    num_nodes = 8          # nodes per graph
    num_graphs = 4
    hid = 128              # module-defined hidden size
    n_total = num_nodes * num_graphs

    key = jax.random.PRNGKey(0)
    k_x, k_p = jax.random.split(key)

    x = jax.random.normal(k_x, (n_total, num_feat), jnp.float32)
    edge_index = make_ring_edges(num_nodes, num_graphs)        # (2, 64)
    lhat = build_lhat(edge_index, n_total)                     # dense scaled Laplacian
    params = init_params(k_p, num_feat, hid)

    ref = reference_forward(x, lhat, params, num_nodes)

    # 1) Block-diagonal grouped path (2 groups x 2 graphs): exercises the
    #    multi-group grid, resident per-group L_hat, and the parallel group axis.
    #    Planning + padding are hoisted out of the hot path (review item 12).
    cfg = plan_forward(n_total, num_feat, hid, num_nodes, graphs_per_group=2)
    ops = prepare_operands(x, lhat, params, cfg)
    fwd = jax.jit(functools.partial(run_forward, cfg))
    out = jax.block_until_ready(fwd(*ops))
    assert out.shape == (num_graphs, 1), out.shape
    assert bool(jnp.all(jnp.isfinite(out)))
    err = float(jnp.max(jnp.abs(out - ref)))
    assert err < 0.1, f"grouped path mismatch vs reference: {err}"

    # 2) General single-group path (no block-diagonal assumption, resident L_hat).
    fwd2 = jax.jit(functools.partial(chebconv_gnn_forward, num_nodes=num_nodes,
                                     assume_block_diagonal=False))
    out2 = jax.block_until_ready(fwd2(x, lhat, params))
    err2 = float(jnp.max(jnp.abs(out2 - ref)))
    assert out2.shape == (num_graphs, 1) and err2 < 0.1, err2

    # 3) Streamed-L_hat fallback (forced) — exercises the row-slab pipeline path.
    fwd3 = jax.jit(functools.partial(chebconv_gnn_forward, num_nodes=num_nodes,
                                     assume_block_diagonal=False,
                                     force_stream_lhat=True))
    out3 = jax.block_until_ready(fwd3(x, lhat, params))
    err3 = float(jnp.max(jnp.abs(out3 - ref)))
    assert out3.shape == (num_graphs, 1) and err3 < 0.1, err3

    print("KERNEL_OK")
</pallas_src>

<mosaic_0001>
module attributes {stable_mosaic.version = 11 : i64} {
  func.func @_fused_gnn_kernel(%arg0: i32, %arg1: i32, %arg2: i32, %arg3: memref<1x128x128xbf16, #tpu.memory_space<vmem>>, %arg4: memref<1x128x128xbf16, #tpu.memory_space<vmem>>, %arg5: memref<1x2x128x128xbf16, #tpu.memory_space<vmem>>, %arg6: memref<1x1x128xf32, #tpu.memory_space<vmem>>, %arg7: memref<128x128xbf16, #tpu.memory_space<vmem>>, %arg8: memref<1x128xf32, #tpu.memory_space<vmem>>, %arg9: memref<1x128xf32, #tpu.memory_space<vmem>>, %arg10: memref<1x1xf32, #tpu.memory_space<vmem>>, %arg11: memref<1x2x1xf32, #tpu.memory_space<vmem>>, %arg12: memref<128x128xbf16, #tpu.memory_space<vmem>>, %arg13: memref<128x128xbf16, #tpu.memory_space<vmem>>) attributes {dimension_semantics = [#tpu.dimension_semantics<parallel>, #tpu.dimension_semantics<arbitrary>, #tpu.dimension_semantics<arbitrary>], iteration_bounds = array<i64: 2, 4, 1>, scalar_prefetch = 0 : i64, scratch_operands = 2 : i64, tpu.core_type = #tpu.core_type<tc>, window_params = [{transform_indices = @transform_0, window_bounds = array<i64: 1, 128, 128>}, {transform_indices = @transform_1, window_bounds = array<i64: 1, 128, 128>}, {transform_indices = @transform_2, window_bounds = array<i64: 1, 2, 128, 128>}, {transform_indices = @transform_3, window_bounds = array<i64: 1, 1, 128>}, {pipeline_mode = #tpu.pipeline_mode<synchronous>, transform_indices = @transform_4, window_bounds = array<i64: 128, 128>}, {pipeline_mode = #tpu.pipeline_mode<synchronous>, transform_indices = @transform_5, window_bounds = array<i64: 1, 128>}, {pipeline_mode = #tpu.pipeline_mode<synchronous>, transform_indices = @transform_6, window_bounds = array<i64: 1, 128>}, {pipeline_mode = #tpu.pipeline_mode<synchronous>, transform_indices = @transform_7, window_bounds = array<i64: 1, 1>}, {transform_indices = @transform_8, window_bounds = array<i64: 1, 2, 1>}]} {
    %c128_i32 = arith.constant 128 : i32
    %0 = arith.muli %arg2, %c128_i32 : i32
    %1 = tpu.assume_multiple %0, 128 : i32
    %c0 = arith.constant 0 : index
    %2 = arith.index_cast %1 : i32 to index
    %c0_0 = arith.constant 0 : index
    %3 = vector.load %arg3[%c0, %2, %c0_0] : memref<1x128x128xbf16, #tpu.memory_space<vmem>>, vector<1x128x128xbf16>
    %4 = vector.shape_cast %3 : vector<1x128x128xbf16> to vector<128x128xbf16>
    %c0_1 = arith.constant 0 : index
    %c0_2 = arith.constant 0 : index
    %c0_3 = arith.constant 0 : index
    %c0_4 = arith.constant 0 : index
    %5 = vector.load %arg5[%c0_1, %c0_2, %c0_3, %c0_4] : memref<1x2x128x128xbf16, #tpu.memory_space<vmem>>, vector<1x1x128x128xbf16>
    %6 = vector.shape_cast %5 : vector<1x1x128x128xbf16> to vector<128x128xbf16>
    %c0_5 = arith.constant 0 : index
    %c1 = arith.constant 1 : index
    %c0_6 = arith.constant 0 : index
    %c0_7 = arith.constant 0 : index
    %7 = vector.load %arg5[%c0_5, %c1, %c0_6, %c0_7] : memref<1x2x128x128xbf16, #tpu.memory_space<vmem>>, vector<1x1x128x128xbf16>
    %8 = vector.shape_cast %7 : vector<1x1x128x128xbf16> to vector<128x128xbf16>
    %c0_8 = arith.constant 0 : index
    %c0_9 = arith.constant 0 : index
    %c0_10 = arith.constant 0 : index
    %9 = vector.load %arg6[%c0_8, %c0_9, %c0_10] : memref<1x1x128xf32, #tpu.memory_space<vmem>>, vector<1x1x128xf32>
    %10 = vector.shape_cast %9 : vector<1x1x128xf32> to vector<1x128xf32>
    %c3_i32 = arith.constant 3 : i32
    %11 = arith.cmpi slt, %arg1, %c3_i32 : i32
    %cst = arith.constant 1.000000e-01 : f32
    %cst_11 = arith.constant 1.000000e+00 : f32
    %12 = arith.select %11, %cst, %cst_11 : f32
    %c0_i32 = arith.constant 0 : i32
    %13 = arith.cmpi eq, %arg1, %c0_i32 : i32
    %14 = arith.extui %13 : i1 to i32
    %c0_i32_12 = arith.constant 0 : i32
    %15 = arith.cmpi ne, %14, %c0_i32_12 : i32
    scf.if %15 {
      %c0_32 = arith.constant 0 : index
      %c0_33 = arith.constant 0 : index
      %c0_34 = arith.constant 0 : index
      %51 = vector.load %arg4[%c0_32, %c0_33, %c0_34] : memref<1x128x128xbf16, #tpu.memory_space<vmem>>, vector<1x128x128xbf16>
      %52 = vector.shape_cast %51 : vector<1x128x128xbf16> to vector<128x128xbf16>
      %cst_35 = arith.constant dense<0.000000e+00> : vector<128x128xf32>
      %53 = tpu.matmul %4, %52, %cst_35 {dimension_numbers = #tpu.dot_dimension_numbers<[1], [0], [0], [1], [0, 0, 1, 1], [], []>} : vector<128x128xbf16>, vector<128x128xbf16>, vector<128x128xf32> -> vector<128x128xf32>
      %c0_36 = arith.constant 0 : index
      %54 = arith.index_cast %1 : i32 to index
      %c0_37 = arith.constant 0 : index
      %55 = vector.load %arg4[%c0_36, %54, %c0_37] : memref<1x128x128xbf16, #tpu.memory_space<vmem>>, vector<1x128x128xbf16>
      %56 = vector.shape_cast %55 : vector<1x128x128xbf16> to vector<128x128xbf16>
      %cst_38 = arith.constant dense<0.000000e+00> : vector<128x128xf32>
      %57 = tpu.matmul %56, %6, %cst_38 {dimension_numbers = #tpu.dot_dimension_numbers<[1], [0], [0], [1], [0, 0, 1, 1], [], []>} : vector<128x128xbf16>, vector<128x128xbf16>, vector<128x128xf32> -> vector<128x128xf32>
      %58 = arith.truncf %53 : vector<128x128xf32> to vector<128x128xbf16>
      %cst_39 = arith.constant dense<0.000000e+00> : vector<128x128xf32>
      %59 = tpu.matmul %58, %8, %cst_39 {dimension_numbers = #tpu.dot_dimension_numbers<[1], [0], [0], [1], [0, 0, 1, 1], [], []>} : vector<128x128xbf16>, vector<128x128xbf16>, vector<128x128xf32> -> vector<128x128xf32>
      %60 = arith.addf %57, %59 : vector<128x128xf32>
      %61 = vector.broadcast %10 : vector<1x128xf32> to vector<128x128xf32>
      %62 = arith.addf %60, %61 : vector<128x128xf32>
      %cst_40 = arith.constant 0.000000e+00 : f32
      %63 = vector.broadcast %cst_40 : f32 to vector<128x128xf32>
      %64 = arith.cmpf oge, %62, %63 : vector<128x128xf32>
      %65 = vector.broadcast %12 : f32 to vector<128x128xf32>
      %66 = arith.mulf %65, %62 : vector<128x128xf32>
      %67 = arith.select %64, %62, %66 : vector<128x128xi1>, vector<128x128xf32>
      %68 = arith.truncf %67 : vector<128x128xf32> to vector<128x128xbf16>
      %69 = arith.index_cast %1 : i32 to index
      %c0_41 = arith.constant 0 : index
      %70 = vector.load %arg13[%69, %c0_41] : memref<128x128xbf16, #tpu.memory_space<vmem>>, vector<128x128xbf16>
      tpu.vector_store %arg13[%69, %c0_41], %68 {strides = array<i32>} : memref<128x128xbf16, #tpu.memory_space<vmem>>, vector<128x128xbf16>,
    } else {
    }
    %c0_i32_13 = arith.constant 0 : i32
    %16 = arith.cmpi sgt, %arg1, %c0_i32_13 : i32
    %c2_i32 = arith.constant 2 : i32
    %c0_i32_14 = arith.constant 0 : i32
    %17 = arith.cmpi eq, %c2_i32, %c0_i32_14 : i32
    %c1_i32 = arith.constant 1 : i32
    %18 = arith.select %17, %c1_i32, %c2_i32 : i32
    %19 = arith.remsi %arg1, %18 : i32
    %c0_i32_15 = arith.constant 0 : i32
    %20 = arith.cmpi ne, %19, %c0_i32_15 : i32
    %c0_i32_16 = arith.constant 0 : i32
    %21 = arith.cmpi slt, %19, %c0_i32_16 : i32
    %c0_i32_17 = arith.constant 0 : i32
    %22 = arith.cmpi slt, %18, %c0_i32_17 : i32
    %23 = arith.xori %21, %22 : i1
    %24 = arith.andi %23, %20 : i1
    %25 = arith.addi %19, %18 : i32
    %26 = arith.select %24, %25, %19 : i32
    %c1_i32_18 = arith.constant 1 : i32
    %27 = arith.cmpi eq, %26, %c1_i32_18 : i32
    %28 = arith.andi %16, %27 : i1
    %29 = arith.extui %28 : i1 to i32
    %c0_i32_19 = arith.constant 0 : i32
    %30 = arith.cmpi ne, %29, %c0_i32_19 : i32
    scf.if %30 {
      %c0_32 = arith.constant 0 : index
      %c0_33 = arith.constant 0 : index
      %51 = vector.load %arg13[%c0_32, %c0_33] : memref<128x128xbf16, #tpu.memory_space<vmem>>, vector<128x128xbf16>
      %cst_34 = arith.constant dense<0.000000e+00> : vector<128x128xf32>
      %52 = tpu.matmul %4, %51, %cst_34 {dimension_numbers = #tpu.dot_dimension_numbers<[1], [0], [0], [1], [0, 0, 1, 1], [], []>} : vector<128x128xbf16>, vector<128x128xbf16>, vector<128x128xf32> -> vector<128x128xf32>
      %53 = arith.index_cast %1 : i32 to index
      %c0_35 = arith.constant 0 : index
      %54 = vector.load %arg13[%53, %c0_35] : memref<128x128xbf16, #tpu.memory_space<vmem>>, vector<128x128xbf16>
      %cst_36 = arith.constant dense<0.000000e+00> : vector<128x128xf32>
      %55 = tpu.matmul %54, %6, %cst_36 {dimension_numbers = #tpu.dot_dimension_numbers<[1], [0], [0], [1], [0, 0, 1, 1], [], []>} : vector<128x128xbf16>, vector<128x128xbf16>, vector<128x128xf32> -> vector<128x128xf32>
      %56 = arith.truncf %52 : vector<128x128xf32> to vector<128x128xbf16>
      %cst_37 = arith.constant dense<0.000000e+00> : vector<128x128xf32>
      %57 = tpu.matmul %56, %8, %cst_37 {dimension_numbers = #tpu.dot_dimension_numbers<[1], [0], [0], [1], [0, 0, 1, 1], [], []>} : vector<128x128xbf16>, vector<128x128xbf16>, vector<128x128xf32> -> vector<128x128xf32>
      %58 = arith.addf %55, %57 : vector<128x128xf32>
      %59 = vector.broadcast %10 : vector<1x128xf32> to vector<128x128xf32>
      %60 = arith.addf %58, %59 : vector<128x128xf32>
      %cst_38 = arith.constant 0.000000e+00 : f32
      %61 = vector.broadcast %cst_38 : f32 to vector<128x128xf32>
      %62 = arith.cmpf oge, %60, %61 : vector<128x128xf32>
      %63 = vector.broadcast %12 : f32 to vector<128x128xf32>
      %64 = arith.mulf %63, %60 : vector<128x128xf32>
      %65 = arith.select %62, %60, %64 : vector<128x128xi1>, vector<128x128xf32>
      %66 = arith.truncf %65 : vector<128x128xf32> to vector<128x128xbf16>
      %67 = arith.index_cast %1 : i32 to index
      %c0_39 = arith.constant 0 : index
      %68 = vector.load %arg12[%67, %c0_39] : memref<128x128xbf16, #tpu.memory_space<vmem>>, vector<128x128xbf16>
      tpu.vector_store %arg12[%67, %c0_39], %66 {strides = array<i32>} : memref<128x128xbf16, #tpu.memory_space<vmem>>, vector<128x128xbf16>,
    } else {
    }
    %c0_i32_20 = arith.constant 0 : i32
    %31 = arith.cmpi sgt, %arg1, %c0_i32_20 : i32
    %c2_i32_21 = arith.constant 2 : i32
    %c0_i32_22 = arith.constant 0 : i32
    %32 = arith.cmpi eq, %c2_i32_21, %c0_i32_22 : i32
    %c1_i32_23 = arith.constant 1 : i32
    %33 = arith.select %32, %c1_i32_23, %c2_i32_21 : i32
    %34 = arith.remsi %arg1, %33 : i32
    %c0_i32_24 = arith.constant 0 : i32
    %35 = arith.cmpi ne, %34, %c0_i32_24 : i32
    %c0_i32_25 = arith.constant 0 : i32
    %36 = arith.cmpi slt, %34, %c0_i32_25 : i32
    %c0_i32_26 = arith.constant 0 : i32
    %37 = arith.cmpi slt, %33, %c0_i32_26 : i32
    %38 = arith.xori %36, %37 : i1
    %39 = arith.andi %38, %35 : i1
    %40 = arith.addi %34, %33 : i32
    %41 = arith.select %39, %40, %34 : i32
    %c0_i32_27 = arith.constant 0 : i32
    %42 = arith.cmpi eq, %41, %c0_i32_27 : i32
    %43 = arith.andi %31, %42 : i1
    %44 = arith.extui %43 : i1 to i32
    %c0_i32_28 = arith.constant 0 : i32
    %45 = arith.cmpi ne, %44, %c0_i32_28 : i32
    scf.if %45 {
      %c0_32 = arith.constant 0 : index
      %c0_33 = arith.constant 0 : index
      %51 = vector.load %arg12[%c0_32, %c0_33] : memref<128x128xbf16, #tpu.memory_space<vmem>>, vector<128x128xbf16>
      %cst_34 = arith.constant dense<0.000000e+00> : vector<128x128xf32>
      %52 = tpu.matmul %4, %51, %cst_34 {dimension_numbers = #tpu.dot_dimension_numbers<[1], [0], [0], [1], [0, 0, 1, 1], [], []>} : vector<128x128xbf16>, vector<128x128xbf16>, vector<128x128xf32> -> vector<128x128xf32>
      %53 = arith.index_cast %1 : i32 to index
      %c0_35 = arith.constant 0 : index
      %54 = vector.load %arg12[%53, %c0_35] : memref<128x128xbf16, #tpu.memory_space<vmem>>, vector<128x128xbf16>
      %cst_36 = arith.constant dense<0.000000e+00> : vector<128x128xf32>
      %55 = tpu.matmul %54, %6, %cst_36 {dimension_numbers = #tpu.dot_dimension_numbers<[1], [0], [0], [1], [0, 0, 1, 1], [], []>} : vector<128x128xbf16>, vector<128x128xbf16>, vector<128x128xf32> -> vector<128x128xf32>
      %56 = arith.truncf %52 : vector<128x128xf32> to vector<128x128xbf16>
      %cst_37 = arith.constant dense<0.000000e+00> : vector<128x128xf32>
      %57 = tpu.matmul %56, %8, %cst_37 {dimension_numbers = #tpu.dot_dimension_numbers<[1], [0], [0], [1], [0, 0, 1, 1], [], []>} : vector<128x128xbf16>, vector<128x128xbf16>, vector<128x128xf32> -> vector<128x128xf32>
      %58 = arith.addf %55, %57 : vector<128x128xf32>
      %59 = vector.broadcast %10 : vector<1x128xf32> to vector<128x128xf32>
      %60 = arith.addf %58, %59 : vector<128x128xf32>
      %cst_38 = arith.constant 0.000000e+00 : f32
      %61 = vector.broadcast %cst_38 : f32 to vector<128x128xf32>
      %62 = arith.cmpf oge, %60, %61 : vector<128x128xf32>
      %63 = vector.broadcast %12 : f32 to vector<128x128xf32>
      %64 = arith.mulf %63, %60 : vector<128x128xf32>
      %65 = arith.select %62, %60, %64 : vector<128x128xi1>, vector<128x128xf32>
      %66 = arith.truncf %65 : vector<128x128xf32> to vector<128x128xbf16>
      %67 = arith.index_cast %1 : i32 to index
      %c0_39 = arith.constant 0 : index
      %68 = vector.load %arg13[%67, %c0_39] : memref<128x128xbf16, #tpu.memory_space<vmem>>, vector<128x128xbf16>
      tpu.vector_store %arg13[%67, %c0_39], %66 {strides = array<i32>} : memref<128x128xbf16, #tpu.memory_space<vmem>>, vector<128x128xbf16>,
    } else {
    }
    %c3_i32_29 = arith.constant 3 : i32
    %46 = arith.cmpi eq, %arg1, %c3_i32_29 : i32
    %c0_i32_30 = arith.constant 0 : i32
    %47 = arith.cmpi eq, %arg2, %c0_i32_30 : i32
    %48 = arith.andi %46, %47 : i1
    %49 = arith.extui %48 : i1 to i32
    %c0_i32_31 = arith.constant 0 : i32
    %50 = arith.cmpi ne, %49, %c0_i32_31 : i32
    scf.if %50 {
      %c0_32 = arith.constant 0 : index
      %c0_33 = arith.constant 0 : index
      %51 = vector.load %arg12[%c0_32, %c0_33] : memref<128x128xbf16, #tpu.memory_space<vmem>>, vector<1x128xbf16>
      %c8 = arith.constant 8 : index
      %c0_34 = arith.constant 0 : index
      %52 = vector.load %arg12[%c8, %c0_34] : memref<128x128xbf16, #tpu.memory_space<vmem>>, vector<1x128xbf16>
      %53 = tpu.concatenate %51, %52 in 0 : vector<1x128xbf16>, vector<1x128xbf16> -> vector<2x128xbf16>
      %c0_35 = arith.constant 0 : index
      %c0_36 = arith.constant 0 : index
      %54 = vector.load %arg7[%c0_35, %c0_36] : memref<128x128xbf16, #tpu.memory_space<vmem>>, vector<128x128xbf16>
      %cst_37 = arith.constant dense<0.000000e+00> : vector<2x128xf32>
      %55 = tpu.matmul %53, %54, %cst_37 {dimension_numbers = #tpu.dot_dimension_numbers<[1], [0], [0], [1], [0, 0, 1, 1], [], []>} : vector<2x128xbf16>, vector<128x128xbf16>, vector<2x128xf32> -> vector<2x128xf32>
      %c0_38 = arith.constant 0 : index
      %c0_39 = arith.constant 0 : index
      %56 = vector.load %arg8[%c0_38, %c0_39] : memref<1x128xf32, #tpu.memory_space<vmem>>, vector<1x128xf32>
      %57 = vector.broadcast %56 : vector<1x128xf32> to vector<2x128xf32>
      %58 = arith.addf %55, %57 : vector<2x128xf32>
      %cst_40 = arith.constant 0.000000e+00 : f32
      %59 = vector.broadcast %cst_40 : f32 to vector<2x128xf32>
      %60 = arith.cmpf oge, %58, %59 : vector<2x128xf32>
      %cst_41 = arith.constant 1.000000e-01 : f32
      %61 = vector.broadcast %cst_41 : f32 to vector<2x128xf32>
      %62 = arith.mulf %61, %58 : vector<2x128xf32>
      %63 = arith.select %60, %58, %62 : vector<2x128xi1>, vector<2x128xf32>
      %c0_42 = arith.constant 0 : index
      %c0_43 = arith.constant 0 : index
      %64 = vector.load %arg9[%c0_42, %c0_43] : memref<1x128xf32, #tpu.memory_space<vmem>>, vector<1x128xf32>
      %65 = vector.broadcast %64 : vector<1x128xf32> to vector<2x128xf32>
      %66 = arith.mulf %63, %65 : vector<2x128xf32>
      %cst_44 = arith.constant dense<0.000000e+00> : vector<2xf32>
      %67 = vector.multi_reduction <add>, %66, %cst_44 [1] : vector<2x128xf32> to vector<2xf32>
      %68 = vector.shape_cast %67 : vector<2xf32> to vector<2x1xf32>
      %c0_45 = arith.constant 0 : index
      %c0_46 = arith.constant 0 : index
      %69 = vector.load %arg10[%c0_45, %c0_46] : memref<1x1xf32, #tpu.memory_space<vmem>>, vector<1x1xf32>
      %70 = vector.broadcast %69 : vector<1x1xf32> to vector<2x1xf32>
      %71 = arith.addf %68, %70 : vector<2x1xf32>
      %c0_47 = arith.constant 0 : index
      %c0_48 = arith.constant 0 : index
      %c0_49 = arith.constant 0 : index
      %72 = vector.load %arg11[%c0_47, %c0_48, %c0_49] : memref<1x2x1xf32, #tpu.memory_space<vmem>>, vector<1x2x1xf32>
      %73 = vector.shape_cast %72 : vector<1x2x1xf32> to vector<2x1xf32>
      %74 = vector.shape_cast %71 : vector<2x1xf32> to vector<1x2x1xf32>
      tpu.vector_store %arg11[%c0_47, %c0_48, %c0_49], %74 {strides = array<i32>} : memref<1x2x1xf32, #tpu.memory_space<vmem>>, vector<1x2x1xf32>,
    } else {
    }
    return
  }
  func.func @transform_0(%arg0: i32, %arg1: i32, %arg2: i32) -> (i32, i32, i32) {
    %c0_i32 = arith.constant 0 : i32
    %c0_i32_0 = arith.constant 0 : i32
    %c0_i32_1 = arith.constant 0 : i32
    return %arg0, %c0_i32, %c0_i32_0 : i32, i32, i32
  }
  func.func @transform_1(%arg0: i32, %arg1: i32, %arg2: i32) -> (i32, i32, i32) {
    %c0_i32 = arith.constant 0 : i32
    %c0_i32_0 = arith.constant 0 : i32
    %c0_i32_1 = arith.constant 0 : i32
    return %arg0, %c0_i32, %c0_i32_0 : i32, i32, i32
  }
  func.func @transform_2(%arg0: i32, %arg1: i32, %arg2: i32) -> (i32, i32, i32, i32) {
    %c0_i32 = arith.constant 0 : i32
    %c0_i32_0 = arith.constant 0 : i32
    %c0_i32_1 = arith.constant 0 : i32
    %c0_i32_2 = arith.constant 0 : i32
    return %arg1, %c0_i32, %c0_i32_0, %c0_i32_1 : i32, i32, i32, i32
  }
  func.func @transform_3(%arg0: i32, %arg1: i32, %arg2: i32) -> (i32, i32, i32) {
    %c0_i32 = arith.constant 0 : i32
    %c0_i32_0 = arith.constant 0 : i32
    %c0_i32_1 = arith.constant 0 : i32
    return %arg1, %c0_i32, %c0_i32_0 : i32, i32, i32
  }
  func.func @transform_4(%arg0: i32, %arg1: i32, %arg2: i32) -> (i32, i32) {
    %c0_i32 = arith.constant 0 : i32
    %c0_i32_0 = arith.constant 0 : i32
    %c0_i32_1 = arith.constant 0 : i32
    return %c0_i32, %c0_i32_0 : i32, i32
  }
  func.func @transform_5(%arg0: i32, %arg1: i32, %arg2: i32) -> (i32, i32) {
    %c0_i32 = arith.constant 0 : i32
    %c0_i32_0 = arith.constant 0 : i32
    %c0_i32_1 = arith.constant 0 : i32
    return %c0_i32, %c0_i32_0 : i32, i32
  }
  func.func @transform_6(%arg0: i32, %arg1: i32, %arg2: i32) -> (i32, i32) {
    %c0_i32 = arith.constant 0 : i32
    %c0_i32_0 = arith.constant 0 : i32
    %c0_i32_1 = arith.constant 0 : i32
    return %c0_i32, %c0_i32_0 : i32, i32
  }
  func.func @transform_7(%arg0: i32, %arg1: i32, %arg2: i32) -> (i32, i32) {
    %c0_i32 = arith.constant 0 : i32
    %c0_i32_0 = arith.constant 0 : i32
    %c0_i32_1 = arith.constant 0 : i32
    return %c0_i32, %c0_i32_0 : i32, i32
  }
  func.func @transform_8(%arg0: i32, %arg1: i32, %arg2: i32) -> (i32, i32, i32) {
    %c0_i32 = arith.constant 0 : i32
    %c0_i32_0 = arith.constant 0 : i32
    %c0_i32_1 = arith.constant 0 : i32
    return %arg0, %c0_i32, %c0_i32_0 : i32, i32, i32
  }
}

</mosaic_0001>

<llo_original>
// kernel: run_forward.1
$region0: #{run_forward.1}
  #allocation0 [shape = 'u32[]', space=smem, size = 0x4, offset = 0x4, fixed_abs, tag = 'smem constant byte address 0x4 - core index']
  #allocation1 [shape = 'u32[144,128]{1,0:T(1,128)}', space=vmem, size = 0x12000, scoped, tag = 'internal scratch']
  #allocation2 [shape = 'bf16[128,128]{1,0:T(16,128)(2,1)}', space=vmem, size = 0x8000, scoped, tag = 'scratch operand']
  #allocation3 [shape = 'bf16[128,128]{1,0:T(16,128)(2,1)}', space=vmem, size = 0x8000, scoped, tag = 'scratch operand']
  #allocation4 [shape = 'f32[1,1]{1,0:T(1,128)S(1)}', space=vmem, size = 0x200, scoped, tag = 'scoped memory for run_forward.1']
  %s0 = inlined_call_operand.hbm [shape: bf16[2,128,128], index: 0, kind: input, shape index: {}]
  %s1 = inlined_call_operand.hbm [shape: bf16[2,128,128], index: 1, kind: input, shape index: {}]
  %s2 = inlined_call_operand.hbm [shape: bf16[4,2,128,128], index: 2, kind: input, shape index: {}]
  %s3 = inlined_call_operand.vmem [shape: f32[4,1,128], index: 3, kind: input, shape index: {}]
  %s4 = inlined_call_operand.hbm [shape: bf16[128,128], index: 4, kind: input, shape index: {}]
  %s5 = inlined_call_operand.vmem [shape: f32[1,128], index: 5, kind: input, shape index: {}]
  %s6 = inlined_call_operand.vmem [shape: f32[1,128], index: 6, kind: input, shape index: {}]
  %s7 = inlined_call_operand.<no memory space> [shape: f32[1,1], index: 7, kind: input, shape index: {}]
  %s8 = inlined_call_operand.vmem [shape: f32[2,2,1], index: 8, kind: output, shape index: {}]
  %s9 = sld [smem:[#allocation0]]
  $region97: #{run_forward.1} parent=0
    _
  %s11 = ssub.s32 1, %s9
  %s12 = scalar_select 0, %s11, %s9
  %v13 = vstv %s7
  %14 = vst [vmem:[#allocation4] sm:$0x1] %v13
  $region1: #{run_forward.1} parent=0
    #allocation5 [shape = 'u8[65536]{0}', space=vmem, size = 0x10000, scoped, tag = 'input window, operand 0']
    #allocation6 [shape = 's32[2]{0}', space=sflag, size = 0x8, scoped, tag = 'scoped memory for run_forward.1']
    #allocation7 [shape = 'u8[65536]{0}', space=vmem, size = 0x10000, scoped, tag = 'input window, operand 1']
    #allocation8 [shape = 's32[2]{0}', space=sflag, size = 0x8, scoped, tag = 'scoped memory for run_forward.1']
    #allocation9 [shape = 'u8[131072]{0}', space=vmem, size = 0x20000, scoped, tag = 'input window, operand 2']
    #allocation10 [shape = 'u8[32768]{0}', space=vmem, size = 0x8000, scoped, tag = 'input window, operand 4, single buffered']
    #allocation11 [shape = 's32[1]{0}', space=sflag, size = 0x4, scoped, tag = 'scoped memory for run_forward.1']
    %15 = vsyncpa [#allocation6], 0
    %s16 = scalar_lea.sflag [#allocation6], 1
    %17 = vsyncpa %s16, 0
    %18 = vsyncpa [#allocation8], 0
    %s19 = scalar_lea.sflag [#allocation8], 1
    %20 = vsyncpa %s19, 0
    %21 = vsyncpa [#allocation11], 0
    loop: start=0, step=1, limit=10
    $region2: #{run_forward.1} parent=1 // loop_pre_header
      _
    $region3: #{run_forward.1} parent=1 // loop_header
      %s23 = sphi 0, %s27
      %p24 = scmp.ge.s32.totalorder %s23, 10
      %s30 = sphi 0, %s49
      %s31 = sphi 0, %s45
      %s32 = sphi 0, %s41
      %s33 = sphi 0, %s30
      %s34 = sphi 0, %s31
      %s35 = sphi 0, %s32
      %s36 = sphi 0, %s33
      %s37 = sphi 0, %s34
      %s38 = sphi 0, %s35
      %s52 = sphi 0, %s54
      %s55 = sphi 0, %s52
      %s56 = sphi 0, %s55
      %s72 = sphi 0, %s56
      %s78 = sphi 0, %s80
      %s81 = sphi 0, %s78
      %s82 = sphi 0, %s81
      %s98 = sphi 0, %s82
      %s104 = sphi 0, %s106
      %s107 = sphi 0, %s104
      %s108 = sphi 0, %s107
      %s124 = sphi 0, %s108
      %s130 = sphi 0, %s132
      %s133 = sphi 0, %s130
      %s134 = sphi 0, %s133
      %s150 = sphi 0, %s134
      %s154 = sphi 0, %s154
      %s156 = sphi 0, %s154
      %s157 = sphi 0, %s156
      %s171 = sphi 0, %s157
      %s175 = sphi 0, %s175
      %s177 = sphi 0, %s175
      %s178 = sphi 0, %s177
      %s192 = sphi 0, %s178
      %s196 = sphi 0, %s196
      %s198 = sphi 0, %s196
      %s199 = sphi 0, %s198
      %s213 = sphi 0, %s199
      %s217 = sphi 0, %s217
      %s219 = sphi 0, %s217
      %s220 = sphi 0, %s219
      %s234 = sphi 0, %s220
      %s240 = sphi 0, %s242
      %s243 = sphi 0, %s240
      %s244 = sphi 0, %s243
      %s260 = sphi 0, %s244
    $region4: #{run_forward.1} parent=1 // loop_header_branch
      %26 = sbr.rel (%p24) target = $region8
    $region5: #{run_forward.1} parent=1 // loop_body
      %s28 = ssub.s32 %s23, 1
      %s29 = ssub.s32 %s23, 2
      %s39 = sadd.s32 1, %s32
      %p40 = scmp.ge.s32.totalorder %s39, 1
      %s41 = scalar_select %p40, 0, %s39
      %s42 = sadd.s32 1, %s31
      %s43 = scalar_select %p40, %s42, %s31
      %p44 = scmp.ge.s32.totalorder %s43, 4
      %s45 = scalar_select %p44, 0, %s43
      %s46 = sadd.s32 1, %s30
      %s47 = scalar_select %p44, %s46, %s30
      %p48 = scmp.ge.s32.totalorder %s47, 2
      %s49 = scalar_select %p48, 0, %s47
      %s50 = ssub.s32 %s30, %s49
      %p51 = scmp.eq.s32.totalorder %s50, 0
      %s53 = sadd.s32 %s52, 1
      %s54 = scalar_select %p51, %s52, %s53
      %p57 = pneg %p51
      %p58 = scmp.eq.s32.totalorder %s23, 7
      %p59 = por %p57, %p58
      %p60 = scmp.ne.s32.totalorder %s52, %s55
      %p61 = scmp.eq.s32.totalorder %s23, 0
      %p62 = por %p60, %p61
      %p63 = scmp.ne.s32.totalorder %s52, %s55
      %p64 = scmp.eq.s32.totalorder %s28, 7
      %p65 = por %p63, %p64
      %p66 = scmp.ne.s32.totalorder %s55, %s56
      %p67 = scmp.eq.s32.totalorder %s28, 0
      %p68 = por %p66, %p67
      %p69 = scmp.ne.s32.totalorder %s55, %s56
      %p70 = scmp.eq.s32.totalorder %s29, 7
      %p71 = por %p69, %p70
      %p73 = scmp.ne.s32.totalorder %s56, %s72
      %p74 = scmp.eq.s32.totalorder %s29, 0
      %p75 = por %p73, %p74
      %s76 = ssub.s32 %s30, %s49
      %p77 = scmp.eq.s32.totalorder %s76, 0
      %s79 = sadd.s32 %s78, 1
      %s80 = scalar_select %p77, %s78, %s79
      %p83 = pneg %p77
      %p84 = scmp.eq.s32.totalorder %s23, 7
      %p85 = por %p83, %p84
      %p86 = scmp.ne.s32.totalorder %s78, %s81
      %p87 = scmp.eq.s32.totalorder %s23, 0
      %p88 = por %p86, %p87
      %p89 = scmp.ne.s32.totalorder %s78, %s81
      %p90 = scmp.eq.s32.totalorder %s28, 7
      %p91 = por %p89, %p90
      %p92 = scmp.ne.s32.totalorder %s81, %s82
      %p93 = scmp.eq.s32.totalorder %s28, 0
      %p94 = por %p92, %p93
      %p95 = scmp.ne.s32.totalorder %s81, %s82
      %p96 = scmp.eq.s32.totalorder %s29, 7
      %p97 = por %p95, %p96
      %p99 = scmp.ne.s32.totalorder %s82, %s98
      %p100 = scmp.eq.s32.totalorder %s29, 0
      %p101 = por %p99, %p100
      %s102 = ssub.s32 %s31, %s45
      %p103 = scmp.eq.s32.totalorder %s102, 0
      %s105 = sadd.s32 %s104, 1
      %s106 = scalar_select %p103, %s104, %s105
      %p109 = pneg %p103
      %p110 = scmp.eq.s32.totalorder %s23, 7
      %p111 = por %p109, %p110
      %p112 = scmp.ne.s32.totalorder %s104, %s107
      %p113 = scmp.eq.s32.totalorder %s23, 0
      %p114 = por %p112, %p113
      %p115 = scmp.ne.s32.totalorder %s104, %s107
      %p116 = scmp.eq.s32.totalorder %s28, 7
      %p117 = por %p115, %p116
      %p118 = scmp.ne.s32.totalorder %s107, %s108
      %p119 = scmp.eq.s32.totalorder %s28, 0
      %p120 = por %p118, %p119
      %p121 = scmp.ne.s32.totalorder %s107, %s108
      %p122 = scmp.eq.s32.totalorder %s29, 7
      %p123 = por %p121, %p122
      %p125 = scmp.ne.s32.totalorder %s108, %s124
      %p126 = scmp.eq.s32.totalorder %s29, 0
      %p127 = por %p125, %p126
      %s128 = ssub.s32 %s31, %s45
      %p129 = scmp.eq.s32.totalorder %s128, 0
      %s131 = sadd.s32 %s130, 1
      %s132 = scalar_select %p129, %s130, %s131
      %p135 = pneg %p129
      %p136 = scmp.eq.s32.totalorder %s23, 7
      %p137 = por %p135, %p136
      %p138 = scmp.ne.s32.totalorder %s130, %s133
      %p139 = scmp.eq.s32.totalorder %s23, 0
      %p140 = por %p138, %p139
      %p141 = scmp.ne.s32.totalorder %s130, %s133
      %p142 = scmp.eq.s32.totalorder %s28, 7
      %p143 = por %p141, %p142
      %p144 = scmp.ne.s32.totalorder %s133, %s134
      %p145 = scmp.eq.s32.totalorder %s28, 0
      %p146 = por %p144, %p145
      %p147 = scmp.ne.s32.totalorder %s133, %s134
      %p148 = scmp.eq.s32.totalorder %s29, 7
      %p149 = por %p147, %p148
      %p151 = scmp.ne.s32.totalorder %s134, %s150
      %p152 = scmp.eq.s32.totalorder %s29, 0
      %p153 = por %p151, %p152
      %s155 = sadd.s32 %s154, 1
      %p158 = scmp.eq.s32.totalorder %s23, 7
      %p159 = scmp.ne.s32.totalorder %s154, %s156
      %p160 = scmp.eq.s32.totalorder %s23, 0
      %p161 = por %p159, %p160
      %p162 = scmp.ne.s32.totalorder %s154, %s156
      %p163 = scmp.eq.s32.totalorder %s28, 7
      %p164 = por %p162, %p163
      %p165 = scmp.ne.s32.totalorder %s156, %s157
      %p166 = scmp.eq.s32.totalorder %s28, 0
      %p167 = por %p165, %p166
      %p168 = scmp.ne.s32.totalorder %s156, %s157
      %p169 = scmp.eq.s32.totalorder %s29, 7
      %p170 = por %p168, %p169
      %p172 = scmp.ne.s32.totalorder %s157, %s171
      %p173 = scmp.eq.s32.totalorder %s29, 0
      %p174 = por %p172, %p173
      %s176 = sadd.s32 %s175, 1
      %p179 = scmp.eq.s32.totalorder %s23, 7
      %p180 = scmp.ne.s32.totalorder %s175, %s177
      %p181 = scmp.eq.s32.totalorder %s23, 0
      %p182 = por %p180, %p181
      %p183 = scmp.ne.s32.totalorder %s175, %s177
      %p184 = scmp.eq.s32.totalorder %s28, 7
      %p185 = por %p183, %p184
      %p186 = scmp.ne.s32.totalorder %s177, %s178
      %p187 = scmp.eq.s32.totalorder %s28, 0
      %p188 = por %p186, %p187
      %p189 = scmp.ne.s32.totalorder %s177, %s178
      %p190 = scmp.eq.s32.totalorder %s29, 7
      %p191 = por %p189, %p190
      %p193 = scmp.ne.s32.totalorder %s178, %s192
      %p194 = scmp.eq.s32.totalorder %s29, 0
      %p195 = por %p193, %p194
      %s197 = sadd.s32 %s196, 1
      %p200 = scmp.eq.s32.totalorder %s23, 7
      %p201 = scmp.ne.s32.totalorder %s196, %s198
      %p202 = scmp.eq.s32.totalorder %s23, 0
      %p203 = por %p201, %p202
      %p204 = scmp.ne.s32.totalorder %s196, %s198
      %p205 = scmp.eq.s32.totalorder %s28, 7
      %p206 = por %p204, %p205
      %p207 = scmp.ne.s32.totalorder %s198, %s199
      %p208 = scmp.eq.s32.totalorder %s28, 0
      %p209 = por %p207, %p208
      %p210 = scmp.ne.s32.totalorder %s198, %s199
      %p211 = scmp.eq.s32.totalorder %s29, 7
      %p212 = por %p210, %p211
      %p214 = scmp.ne.s32.totalorder %s199, %s213
      %p215 = scmp.eq.s32.totalorder %s29, 0
      %p216 = por %p214, %p215
      %s218 = sadd.s32 %s217, 1
      %p221 = scmp.eq.s32.totalorder %s23, 7
      %p222 = scmp.ne.s32.totalorder %s217, %s219
      %p223 = scmp.eq.s32.totalorder %s23, 0
      %p224 = por %p222, %p223
      %p225 = scmp.ne.s32.totalorder %s217, %s219
      %p226 = scmp.eq.s32.totalorder %s28, 7
      %p227 = por %p225, %p226
      %p228 = scmp.ne.s32.totalorder %s219, %s220
      %p229 = scmp.eq.s32.totalorder %s28, 0
      %p230 = por %p228, %p229
      %p231 = scmp.ne.s32.totalorder %s219, %s220
      %p232 = scmp.eq.s32.totalorder %s29, 7
      %p233 = por %p231, %p232
      %p235 = scmp.ne.s32.totalorder %s220, %s234
      %p236 = scmp.eq.s32.totalorder %s29, 0
      %p237 = por %p235, %p236
      %s238 = ssub.s32 %s30, %s49
      %p239 = scmp.eq.s32.totalorder %s238, 0
      %s241 = sadd.s32 %s240, 1
      %s242 = scalar_select %p239, %s240, %s241
      %p245 = pneg %p239
      %p246 = scmp.eq.s32.totalorder %s23, 7
      %p247 = por %p245, %p246
      %p248 = scmp.ne.s32.totalorder %s240, %s243
      %p249 = scmp.eq.s32.totalorder %s23, 0
      %p250 = por %p248, %p249
      %p251 = scmp.ne.s32.totalorder %s240, %s243
      %p252 = scmp.eq.s32.totalorder %s28, 7
      %p253 = por %p251, %p252
      %p254 = scmp.ne.s32.totalorder %s243, %s244
      %p255 = scmp.eq.s32.totalorder %s28, 0
      %p256 = por %p254, %p255
      %p257 = scmp.ne.s32.totalorder %s243, %s244
      %p258 = scmp.eq.s32.totalorder %s29, 7
      %p259 = por %p257, %p258
      %p261 = scmp.ne.s32.totalorder %s244, %s260
      %p262 = scmp.eq.s32.totalorder %s29, 0
      %p263 = por %p261, %p262
      %p264 = scmp.le.s32.totalorder 1, %s23
      %p265 = scmp.lt.s32.totalorder %s23, 9
      %p266 = pnand %p264, %p265
      %p267 = pneg %p266
      // Predicated region
      $region9: #{run_forward.1} parent=5 // pred_check
        _
      $region10: #{run_forward.1} parent=5 // pred_check_branch
        %269 = sbr.rel (%p266) target = $region12
      $region11: #{run_forward.1} parent=5 // pred_region
        %s270 = ssub.s32 %s23, 1
        // Predicated region
        $region13: #{run_forward.1} parent=11 // pred_check
          %p271 = pneg %p167
        $region14: #{run_forward.1} parent=11 // pred_check_branch
          %273 = sbr.rel (%p271) target = $region16
        $region15: #{run_forward.1} parent=11 // pred_region
          %s275 = ssub.s32 1024, 1024
          %276 = vsyncadd [#allocation11], %s275
          %s277 = sshll.u32 [#allocation10], 4
          %s278 = int_to_ptr.vmem [resolvable:$true] %s277
          %283 = dma.hbm_to_vmem [thread:$0]  %s4, 1024, %s278, [#allocation11], 64, 64, 4
        $region16: #{run_forward.1} parent=11 // pred_fallthru
          _
        // Predicated region
        $region17: #{run_forward.1} parent=11 // pred_check
          %p284 = pneg %p188
        $region18: #{run_forward.1} parent=11 // pred_check_branch
          %286 = sbr.rel (%p284) target = $region20
        $region19: #{run_forward.1} parent=11 // pred_region
          _
        $region20: #{run_forward.1} parent=11 // pred_fallthru
          _
        // Predicated region
        $region21: #{run_forward.1} parent=11 // pred_check
          %p287 = pneg %p209
        $region22: #{run_forward.1} parent=11 // pred_check_branch
          %289 = sbr.rel (%p287) target = $region24
        $region23: #{run_forward.1} parent=11 // pred_region
          _
        $region24: #{run_forward.1} parent=11 // pred_fallthru
          _
        // Predicated region
        $region25: #{run_forward.1} parent=11 // pred_check
          %p290 = pneg %p230
        $region26: #{run_forward.1} parent=11 // pred_check_branch
          %292 = sbr.rel (%p290) target = $region28
        $region27: #{run_forward.1} parent=11 // pred_region
          _
        $region28: #{run_forward.1} parent=11 // pred_fallthru
          _
      $region12: #{run_forward.1} parent=5 // pred_fallthru
        _
      %p293 = scmp.lt.s32.totalorder %s23, 8
      // Predicated region
      $region29: #{run_forward.1} parent=5 // pred_check
        %p294 = pneg %p293
      $region30: #{run_forward.1} parent=5 // pred_check_branch
        %296 = sbr.rel (%p294) target = $region32
      $region31: #{run_forward.1} parent=5 // pred_region
        // Predicated region
        $region33: #{run_forward.1} parent=31 // pred_check
          %p297 = pneg %p62
        $region34: #{run_forward.1} parent=31 // pred_check_branch
          %299 = sbr.rel (%p297) target = $region36
        $region35: #{run_forward.1} parent=31 // pred_region
          %s300 = sand.u32 %s52, 1
          %s301 = scalar_lea.sflag [#allocation6], %s300
          %s302 = sand.u32 %s52, 1
          %s303 = smul.addr %s302, 64
          %s304 = scalar_lea.vmem [#allocation5], %s303
          %s306 = ssub.s32 1024, 1024
          %307 = vsyncadd %s301, %s306
          %s308 = smul.addr %s30, 16
          %s309 = smul.addr %s308, 64
          %s310 = scalar_lea.hbm %s0, %s309
          %s311 = sshll.u32 %s304, 4
          %s312 = int_to_ptr.vmem [resolvable:$true] %s311
          %317 = dma.hbm_to_vmem [thread:$0]  %s310, 1024, %s312, %s301, 64, 64, 4
        $region36: #{run_forward.1} parent=31 // pred_fallthru
          _
        // Predicated region
        $region37: #{run_forward.1} parent=31 // pred_check
          %p318 = pneg %p88
        $region38: #{run_forward.1} parent=31 // pred_check_branch
          %320 = sbr.rel (%p318) target = $region40
        $region39: #{run_forward.1} parent=31 // pred_region
          %s321 = sand.u32 %s23, 1
          %s322 = scalar_lea.sflag [#allocation8], %s321
          %s323 = sand.u32 %s78, 1
          %s324 = smul.addr %s323, 64
          %s325 = scalar_lea.vmem [#allocation7], %s324
          %s327 = ssub.s32 1024, 1024
          %328 = vsyncadd %s322, %s327
          %s329 = smul.addr %s30, 16
          %s330 = smul.addr %s329, 64
          %s331 = scalar_lea.hbm %s1, %s330
          %s332 = sshll.u32 %s325, 4
          %s333 = int_to_ptr.vmem [resolvable:$true] %s332
          %338 = dma.hbm_to_vmem [thread:$0]  %s331, 1024, %s333, %s322, 64, 64, 4
        $region40: #{run_forward.1} parent=31 // pred_fallthru
          _
        // Predicated region
        $region41: #{run_forward.1} parent=31 // pred_check
          %p339 = pneg %p114
        $region42: #{run_forward.1} parent=31 // pred_check_branch
          %341 = sbr.rel (%p339) target = $region44
        $region43: #{run_forward.1} parent=31 // pred_region
          %s342 = sand.u32 %s23, 1
          %s343 = scalar_lea.sflag [#allocation8], %s342
          %s344 = sand.u32 %s104, 1
          %s345 = smul.addr %s344, 128
          %s346 = scalar_lea.vmem [#allocation9], %s345
          %s348 = ssub.s32 2048, 2048
          %349 = vsyncadd %s343, %s348
          %s350 = smul.addr %s31, 32
          %s351 = smul.addr %s350, 64
          %s352 = scalar_lea.hbm %s2, %s351
          %s353 = sshll.u32 %s346, 4
          %s354 = int_to_ptr.vmem [resolvable:$true] %s353
          %359 = dma.hbm_to_vmem [thread:$0]  %s352, 2048, %s354, %s343, 64, 64, 4
        $region44: #{run_forward.1} parent=31 // pred_fallthru
          _
        // Predicated region
        $region45: #{run_forward.1} parent=31 // pred_check
          %p360 = pneg %p140
        $region46: #{run_forward.1} parent=31 // pred_check_branch
          %362 = sbr.rel (%p360) target = $region48
        $region47: #{run_forward.1} parent=31 // pred_region
          %p363 = scmp.lt.s32.totalorder %s31, 3
          %s364 = scalar_select %p363, %s31, 3
          %s365 = scalar_lea.vmem %s3, %s364
        $region48: #{run_forward.1} parent=31 // pred_fallthru
          _
      $region32: #{run_forward.1} parent=5 // pred_fallthru
        _
      %p366 = scmp.le.s32.totalorder 1, %s23
      %p367 = scmp.lt.s32.totalorder %s23, 9
      %p368 = pnand %p366, %p367
      %p369 = pneg %p368
      // Predicated region
      $region49: #{run_forward.1} parent=5 // pred_check
        _
      $region50: #{run_forward.1} parent=5 // pred_check_branch
        %371 = sbr.rel (%p368) target = $region52
      $region51: #{run_forward.1} parent=5 // pred_region
        %s372 = ssub.s32 %s23, 1
        %s373 = sand.u32 %s55, 1
        %s374 = scalar_lea.sflag [#allocation6], %s373
        %s375 = sand.u32 %s55, 1
        %s376 = smul.addr %s375, 64
        %s377 = scalar_lea.vmem [#allocation5], %s376
        // Predicated region
        $region53: #{run_forward.1} parent=51 // pred_check
          %p378 = pneg %p68
        $region54: #{run_forward.1} parent=51 // pred_check_branch
          %380 = sbr.rel (%p378) target = $region56
        $region55: #{run_forward.1} parent=51 // pred_region
          %381 = dma.done %s374, 1024
        $region56: #{run_forward.1} parent=51 // pred_fallthru
          _
        %s382 = sand.u32 %s28, 1
        %s383 = scalar_lea.sflag [#allocation8], %s382
        %s384 = sand.u32 %s81, 1
        %s385 = smul.addr %s384, 64
        %s386 = scalar_lea.vmem [#allocation7], %s385
        // Predicated region
        $region57: #{run_forward.1} parent=51 // pred_check
          %p387 = pneg %p94
        $region58: #{run_forward.1} parent=51 // pred_check_branch
          %389 = sbr.rel (%p387) target = $region60
        $region59: #{run_forward.1} parent=51 // pred_region
          %390 = dma.done %s383, 1024
        $region60: #{run_forward.1} parent=51 // pred_fallthru
          _
        %s391 = sand.u32 %s28, 1
        %s392 = scalar_lea.sflag [#allocation8], %s391
        %s393 = sand.u32 %s107, 1
        %s394 = smul.addr %s393, 128
        %s395 = scalar_lea.vmem [#allocation9], %s394
        // Predicated region
        $region61: #{run_forward.1} parent=51 // pred_check
          %p396 = pneg %p120
        $region62: #{run_forward.1} parent=51 // pred_check_branch
          %398 = sbr.rel (%p396) target = $region64
        $region63: #{run_forward.1} parent=51 // pred_region
          %399 = dma.done %s392, 2048
        $region64: #{run_forward.1} parent=51 // pred_fallthru
          _
        // Predicated region
        $region65: #{run_forward.1} parent=51 // pred_check
          %p400 = pneg %p167
        $region66: #{run_forward.1} parent=51 // pred_check_branch
          %402 = sbr.rel (%p400) target = $region68
        $region67: #{run_forward.1} parent=51 // pred_region
          %403 = dma.done [#allocation11], 1024
        $region68: #{run_forward.1} parent=51 // pred_fallthru
          _
        %s404 = sand.u32 %s55, 1
        %s405 = scalar_lea.sflag [#allocation6], %s404
        %s406 = sand.u32 %s55, 1
        %s407 = smul.addr %s406, 64
        %s408 = scalar_lea.vmem [#allocation5], %s407
        %p409 = pneg %p68
        %p410 = pneg %p65
        %s411 = sand.u32 %s28, 1
        %s412 = scalar_lea.sflag [#allocation8], %s411
        %s413 = sand.u32 %s81, 1
        %s414 = smul.addr %s413, 64
        %s415 = scalar_lea.vmem [#allocation7], %s414
        %p416 = pneg %p94
        %p417 = pneg %p91
        %s418 = sand.u32 %s28, 1
        %s419 = scalar_lea.sflag [#allocation8], %s418
        %s420 = sand.u32 %s107, 1
        %s421 = smul.addr %s420, 128
        %s422 = scalar_lea.vmem [#allocation9], %s421
        %p423 = pneg %p120
        %p424 = pneg %p117
        %p425 = scmp.lt.s32.totalorder %s34, 3
        %s426 = scalar_select %p425, %s34, 3
        %s427 = scalar_lea.vmem %s3, %s426
        %p428 = pneg %p146
        %p429 = pneg %p143
        %p430 = pneg %p167
        %p431 = pneg %p164
        %p432 = pneg %p188
        %p433 = pneg %p185
        %p434 = pneg %p209
        %p435 = pneg %p206
        %p436 = pneg %p230
        %p437 = pneg %p227
        %p438 = pneg %p256
        %p439 = pneg %p253
        %p440 = scmp.lt.s32.totalorder %s33, 1
        %s441 = scalar_select %p440, %s33, 1
        %s442 = smul.addr %s441, 2
        %s443 = scalar_lea.vmem %s8, %s442
        %p444 = scmp.lt.s32.totalorder %s34, 3
        %s445 = scalar_select %p444, %s34, 3
        %s446 = scalar_lea.vmem %s3, %s445
        %p447 = scmp.lt.s32.totalorder %s33, 1
        %s448 = scalar_select %p447, %s33, 1
        %s449 = smul.addr %s448, 2
        %s450 = scalar_lea.vmem %s8, %s449
        %s452 = smul.u32 %s35, 128
        %s453 = sshra.s32 %s452, 3
        %s454 = sand.u32 %s452, 7
        %s455 = smul.addr %s453, 4
        %s456 = scalar_lea.vmem %s377, %s455 [#allocation5]
        %v457 = vld [vmem:[%s456] sm:$0xf]
        %v458 = vld [vmem:[%s456 + $0x4] sm:$0xf]
        %v459 = vld [vmem:[%s456 + $0x8] sm:$0xf]
        %v460 = vld [vmem:[%s456 + $0xc] sm:$0xf]
        %v461 = vld [vmem:[%s456 + $0x10] sm:$0xf]
        %v462 = vld [vmem:[%s456 + $0x14] sm:$0xf]
        %v463 = vld [vmem:[%s456 + $0x18] sm:$0xf]
        %v464 = vld [vmem:[%s456 + $0x1c] sm:$0xf]
        %v465 = vld [vmem:[%s456 + $0x20] sm:$0xf]
        %v466 = vld [vmem:[%s456 + $0x24] sm:$0xf]
        %v467 = vld [vmem:[%s456 + $0x28] sm:$0xf]
        %v468 = vld [vmem:[%s456 + $0x2c] sm:$0xf]
        %v469 = vld [vmem:[%s456 + $0x30] sm:$0xf]
        %v470 = vld [vmem:[%s456 + $0x34] sm:$0xf]
        %v471 = vld [vmem:[%s456 + $0x38] sm:$0xf]
        %v472 = vld [vmem:[%s456 + $0x3c] sm:$0xf]
        %v473 = vld [vmem:[%s395] sm:$0xf]
        %v474 = vld [vmem:[%s395 + $0x4] sm:$0xf]
        %v475 = vld [vmem:[%s395 + $0x8] sm:$0xf]
        %v476 = vld [vmem:[%s395 + $0xc] sm:$0xf]
        %v477 = vld [vmem:[%s395 + $0x10] sm:$0xf]
        %v478 = vld [vmem:[%s395 + $0x14] sm:$0xf]
        %v479 = vld [vmem:[%s395 + $0x18] sm:$0xf]
        %v480 = vld [vmem:[%s395 + $0x1c] sm:$0xf]
        %v481 = vld [vmem:[%s395 + $0x20] sm:$0xf]
        %v482 = vld [vmem:[%s395 + $0x24] sm:$0xf]
        %v483 = vld [vmem:[%s395 + $0x28] sm:$0xf]
        %v484 = vld [vmem:[%s395 + $0x2c] sm:$0xf]
        %v485 = vld [vmem:[%s395 + $0x30] sm:$0xf]
        %v486 = vld [vmem:[%s395 + $0x34] sm:$0xf]
        %v487 = vld [vmem:[%s395 + $0x38] sm:$0xf]
        %v488 = vld [vmem:[%s395 + $0x3c] sm:$0xf]
        %s489 = scalar_lea.vmem %s395, 64 [#allocation9]
        %v490 = vld [vmem:[%s489] sm:$0xf]
        %v491 = vld [vmem:[%s489 + $0x4] sm:$0xf]
        %v492 = vld [vmem:[%s489 + $0x8] sm:$0xf]
        %v493 = vld [vmem:[%s489 + $0xc] sm:$0xf]
        %v494 = vld [vmem:[%s489 + $0x10] sm:$0xf]
        %v495 = vld [vmem:[%s489 + $0x14] sm:$0xf]
        %v496 = vld [vmem:[%s489 + $0x18] sm:$0xf]
        %v497 = vld [vmem:[%s489 + $0x1c] sm:$0xf]
        %v498 = vld [vmem:[%s489 + $0x20] sm:$0xf]
        %v499 = vld [vmem:[%s489 + $0x24] sm:$0xf]
        %v500 = vld [vmem:[%s489 + $0x28] sm:$0xf]
        %v501 = vld [vmem:[%s489 + $0x2c] sm:$0xf]
        %v502 = vld [vmem:[%s489 + $0x30] sm:$0xf]
        %v503 = vld [vmem:[%s489 + $0x34] sm:$0xf]
        %v504 = vld [vmem:[%s489 + $0x38] sm:$0xf]
        %v505 = vld [vmem:[%s489 + $0x3c] sm:$0xf]
        %v506 = vld [vmem:[%s446] sm:$0x1]
        %p507 = scmp.lt.s32.totalorder %s34, 3
        %s508 = scalar_select %p507, 0.1, 1.0
        %p509 = scmp.eq.s32.totalorder %s34, 0
        // Predicated region
        $region69: #{run_forward.1} parent=51 // pred_check
          %p510 = pneg %p509
        $region70: #{run_forward.1} parent=51 // pred_check_branch
          %512 = sbr.rel (%p510) target = $region72
        $region71: #{run_forward.1} parent=51 // pred_region
          %v513 = vld [vmem:[%s386] sm:$0xf]
          %v514 = vld [vmem:[%s386 + $0x4] sm:$0xf]
          %v515 = vld [vmem:[%s386 + $0x8] sm:$0xf]
          %v516 = vld [vmem:[%s386 + $0xc] sm:$0xf]
          %v517 = vld [vmem:[%s386 + $0x10] sm:$0xf]
          %v518 = vld [vmem:[%s386 + $0x14] sm:$0xf]
          %v519 = vld [vmem:[%s386 + $0x18] sm:$0xf]
          %v520 = vld [vmem:[%s386 + $0x1c] sm:$0xf]
          %v521 = vld [vmem:[%s386 + $0x20] sm:$0xf]
          %v522 = vld [vmem:[%s386 + $0x24] sm:$0xf]
          %v523 = vld [vmem:[%s386 + $0x28] sm:$0xf]
          %v524 = vld [vmem:[%s386 + $0x2c] sm:$0xf]
          %v525 = vld [vmem:[%s386 + $0x30] sm:$0xf]
          %v526 = vld [vmem:[%s386 + $0x34] sm:$0xf]
          %v527 = vld [vmem:[%s386 + $0x38] sm:$0xf]
          %v528 = vld [vmem:[%s386 + $0x3c] sm:$0xf]
          %v545 = vunpack.c.l.b16 %v457
          %v546 = vunpack.c.l.b16 %v458
          %v547 = vunpack.c.l.b16 %v459
          %v548 = vunpack.c.l.b16 %v460
          %v549 = vunpack.c.l.b16 %v461
          %v550 = vunpack.c.l.b16 %v462
          %v551 = vunpack.c.l.b16 %v463
          %v552 = vunpack.c.l.b16 %v464
          %v553 = vunpack.c.l.b16 %v465
          %v554 = vunpack.c.l.b16 %v466
          %v555 = vunpack.c.l.b16 %v467
          %v556 = vunpack.c.l.b16 %v468
          %v557 = vunpack.c.l.b16 %v469
          %v558 = vunpack.c.l.b16 %v470
          %v559 = vunpack.c.l.b16 %v471
          %v560 = vunpack.c.l.b16 %v472
          %v561 = vpack.c.b16 %v546, %v545
          %v562 = vpack.c.b16 %v548, %v547
          %v563 = vpack.c.b16 %v550, %v549
          %v564 = vpack.c.b16 %v552, %v551
          %v565 = vpack.c.b16 %v554, %v553
          %v566 = vpack.c.b16 %v556, %v555
          %v567 = vpack.c.b16 %v558, %v557
          %v568 = vpack.c.b16 %v560, %v559
          %v593 = vunpack.c.l.b16 %v513
          %v594 = vunpack.c.l.b16 %v514
          %v595 = vunpack.c.l.b16 %v515
          %v596 = vunpack.c.l.b16 %v516
          %v597 = vunpack.c.l.b16 %v517
          %v598 = vunpack.c.l.b16 %v518
          %v599 = vunpack.c.l.b16 %v519
          %v600 = vunpack.c.l.b16 %v520
          %v601 = vunpack.c.l.b16 %v521
          %v602 = vunpack.c.l.b16 %v522
          %v603 = vunpack.c.l.b16 %v523
          %v604 = vunpack.c.l.b16 %v524
          %v605 = vunpack.c.l.b16 %v525
          %v606 = vunpack.c.l.b16 %v526
          %v607 = vunpack.c.l.b16 %v527
          %v608 = vunpack.c.l.b16 %v528
          %v609 = vpack.c.b16 %v594, %v593
          %v610 = vpack.c.b16 %v596, %v595
          %v611 = vpack.c.b16 %v598, %v597
          %v612 = vpack.c.b16 %v600, %v599
          %v613 = vpack.c.b16 %v602, %v601
          %v614 = vpack.c.b16 %v604, %v603
          %v615 = vpack.c.b16 %v606, %v605
          %v616 = vpack.c.b16 %v608, %v607
          %625 = vmatprep.subr.bf16.mxu0 0
          %626 = vmatpush1.bf16.msra.mxu0 %v609
          %627 = vmatprep.subr.bf16.mxu0 0
          %628 = vmatpush1.bf16.msra.mxu0 %v610
          %629 = vmatprep.subr.bf16.mxu0 0
          %630 = vmatpush1.bf16.msra.mxu0 %v611
          %631 = vmatprep.subr.bf16.mxu0 0
          %632 = vmatpush1.bf16.msra.mxu0 %v612
          %633 = vmatprep.subr.bf16.mxu0 0
          %634 = vmatpush1.bf16.msra.mxu0 %v613
          %635 = vmatprep.subr.bf16.mxu0 0
          %636 = vmatpush1.bf16.msra.mxu0 %v614
          %637 = vmatprep.subr.bf16.mxu0 0
          %638 = vmatpush1.bf16.msra.mxu0 %v615
          %639 = vmatprep.subr.bf16.mxu0 0
          %640 = vmatpush1.bf16.msra.mxu0 %v616
          %641 = vmatprep.subr.bf16.mxu0 0
          %642 = vmatpush1.bf16.msra.mxu0 0
          %643 = vmatprep.subr.bf16.mxu0 0
          %644 = vmatpush1.bf16.msra.mxu0 0
          %645 = vmatprep.subr.bf16.mxu0 0
          %646 = vmatpush1.bf16.msra.mxu0 0
          %647 = vmatprep.subr.bf16.mxu0 0
          %648 = vmatpush1.bf16.msra.mxu0 0
          %649 = vmatprep.subr.bf16.mxu0 0
          %650 = vmatpush1.bf16.msra.mxu0 0
          %651 = vmatprep.subr.bf16.mxu0 0
          %652 = vmatpush1.bf16.msra.mxu0 0
          %653 = vmatprep.subr.bf16.mxu0 0
          %654 = vmatpush1.bf16.msra.mxu0 0
          %655 = vmatprep.subr.bf16.mxu0 0
          %656 = vmatpush1.bf16.msra.mxu0 0
          %657 = vmatprep.mubr.bf16.mxu0 0
          %658 = vmatmul.mubr.bf16.gmra.mrb[0].mxu0 %v561
          %v659 = vpop.f32.mrb[0].mxu0
          %v660 = vadd.f32 0.0, %v659
          %v661 = vpop.f32.mrb[0].mxu0
          %v662 = vpop.f32.mrb[0].mxu0
          %v663 = vadd.f32 0.0, %v662
          %v664 = vpop.f32.mrb[0].mxu0
          %665 = vmatprep.mubr.bf16.mxu0 0
          %666 = vmatmul.mubr.bf16.gmra.mrb[0].mxu0 %v562
          %v667 = vpop.f32.mrb[0].mxu0
          %v668 = vadd.f32 0.0, %v667
          %v669 = vpop.f32.mrb[0].mxu0
          %v670 = vpop.f32.mrb[0].mxu0
          %v671 = vadd.f32 0.0, %v670
          %v672 = vpop.f32.mrb[0].mxu0
          %673 = vmatprep.mubr.bf16.mxu0 0
          %674 = vmatmul.mubr.bf16.gmra.mrb[0].mxu0 %v563
          %v675 = vpop.f32.mrb[0].mxu0
          %v676 = vadd.f32 0.0, %v675
          %v677 = vpop.f32.mrb[0].mxu0
          %v678 = vpop.f32.mrb[0].mxu0
          %v679 = vadd.f32 0.0, %v678
          %v680 = vpop.f32.mrb[0].mxu0
          %681 = vmatprep.mubr.bf16.mxu0 0
          %682 = vmatmul.mubr.bf16.gmra.mrb[0].mxu0 %v564
          %v683 = vpop.f32.mrb[0].mxu0
          %v684 = vadd.f32 0.0, %v683
          %v685 = vpop.f32.mrb[0].mxu0
          %v686 = vpop.f32.mrb[0].mxu0
          %v687 = vadd.f32 0.0, %v686
          %v688 = vpop.f32.mrb[0].mxu0
          %689 = vmatprep.mubr.bf16.mxu0 0
          %690 = vmatmul.mubr.bf16.gmra.mrb[0].mxu0 %v565
          %v691 = vpop.f32.mrb[0].mxu0
          %v692 = vadd.f32 0.0, %v691
          %v693 = vpop.f32.mrb[0].mxu0
          %v694 = vpop.f32.mrb[0].mxu0
          %v695 = vadd.f32 0.0, %v694
          %v696 = vpop.f32.mrb[0].mxu0
          %697 = vmatprep.mubr.bf16.mxu0 0
          %698 = vmatmul.mubr.bf16.gmra.mrb[0].mxu0 %v566
          %v699 = vpop.f32.mrb[0].mxu0
          %v700 = vadd.f32 0.0, %v699
          %v701 = vpop.f32.mrb[0].mxu0
          %v702 = vpop.f32.mrb[0].mxu0
          %v703 = vadd.f32 0.0, %v702
          %v704 = vpop.f32.mrb[0].mxu0
          %705 = vmatprep.mubr.bf16.mxu0 0
          %706 = vmatmul.mubr.bf16.gmra.mrb[0].mxu0 %v567
          %v707 = vpop.f32.mrb[0].mxu0
          %v708 = vadd.f32 0.0, %v707
          %v709 = vpop.f32.mrb[0].mxu0
          %v710 = vpop.f32.mrb[0].mxu0
          %v711 = vadd.f32 0.0, %v710
          %v712 = vpop.f32.mrb[0].mxu0
          %713 = vmatprep.mubr.bf16.mxu0 0
          %714 = vmatmul.mubr.bf16.gmra.mrb[0].mxu0 %v568
          %v715 = vpop.f32.mrb[0].mxu0
          %v716 = vadd.f32 0.0, %v715
          %v717 = vpop.f32.mrb[0].mxu0
          %v718 = vpop.f32.mrb[0].mxu0
          %v719 = vadd.f32 0.0, %v718
          %v720 = vpop.f32.mrb[0].mxu0
          %721 = vdwg.mxu0
          %s722 = smul.addr %s453, 4
          %s723 = scalar_lea.vmem %s386, %s722 [#allocation7]
          %v724 = vld [vmem:[%s723] sm:$0xf]
          %v725 = vld [vmem:[%s723 + $0x4] sm:$0xf]
          %v726 = vld [vmem:[%s723 + $0x8] sm:$0xf]
          %v727 = vld [vmem:[%s723 + $0xc] sm:$0xf]
          %v728 = vld [vmem:[%s723 + $0x10] sm:$0xf]
          %v729 = vld [vmem:[%s723 + $0x14] sm:$0xf]
          %v730 = vld [vmem:[%s723 + $0x18] sm:$0xf]
          %v731 = vld [vmem:[%s723 + $0x1c] sm:$0xf]
          %v732 = vld [vmem:[%s723 + $0x20] sm:$0xf]
          %v733 = vld [vmem:[%s723 + $0x24] sm:$0xf]
          %v734 = vld [vmem:[%s723 + $0x28] sm:$0xf]
          %v735 = vld [vmem:[%s723 + $0x2c] sm:$0xf]
          %v736 = vld [vmem:[%s723 + $0x30] sm:$0xf]
          %v737 = vld [vmem:[%s723 + $0x34] sm:$0xf]
          %v738 = vld [vmem:[%s723 + $0x38] sm:$0xf]
          %v739 = vld [vmem:[%s723 + $0x3c] sm:$0xf]
          %v740 = vpack.c.bf16 %v663, %v660
          %v741 = vpack.c.bf16 %v671, %v668
          %v742 = vpack.c.bf16 %v679, %v676
          %v743 = vpack.c.bf16 %v687, %v684
          %v744 = vpack.c.bf16 %v695, %v692
          %v745 = vpack.c.bf16 %v703, %v700
          %v746 = vpack.c.bf16 %v711, %v708
          %v747 = vpack.c.bf16 %v719, %v716
          %v764 = vunpack.c.l.b16 %v490
          %v765 = vunpack.c.l.b16 %v491
          %v766 = vunpack.c.l.b16 %v492
          %v767 = vunpack.c.l.b16 %v493
          %v768 = vunpack.c.l.b16 %v494
          %v769 = vunpack.c.l.b16 %v495
          %v770 = vunpack.c.l.b16 %v496
          %v771 = vunpack.c.l.b16 %v497
          %v772 = vunpack.c.l.b16 %v498
          %v773 = vunpack.c.l.b16 %v499
          %v774 = vunpack.c.l.b16 %v500
          %v775 = vunpack.c.l.b16 %v501
          %v776 = vunpack.c.l.b16 %v502
          %v777 = vunpack.c.l.b16 %v503
          %v778 = vunpack.c.l.b16 %v504
          %v779 = vunpack.c.l.b16 %v505
          %v780 = vpack.c.b16 %v765, %v764
          %v781 = vpack.c.b16 %v767, %v766
          %v782 = vpack.c.b16 %v769, %v768
          %v783 = vpack.c.b16 %v771, %v770
          %v784 = vpack.c.b16 %v773, %v772
          %v785 = vpack.c.b16 %v775, %v774
          %v786 = vpack.c.b16 %v777, %v776
          %v787 = vpack.c.b16 %v779, %v778
          %796 = vmatprep.subr.bf16.mxu0 0
          %797 = vmatpush1.bf16.msra.mxu0 %v780
          %798 = vmatprep.subr.bf16.mxu0 0
          %799 = vmatpush1.bf16.msra.mxu0 %v781
          %800 = vmatprep.subr.bf16.mxu0 0
          %801 = vmatpush1.bf16.msra.mxu0 %v782
          %802 = vmatprep.subr.bf16.mxu0 0
          %803 = vmatpush1.bf16.msra.mxu0 %v783
          %804 = vmatprep.subr.bf16.mxu0 0
          %805 = vmatpush1.bf16.msra.mxu0 %v784
          %806 = vmatprep.subr.bf16.mxu0 0
          %807 = vmatpush1.bf16.msra.mxu0 %v785
          %808 = vmatprep.subr.bf16.mxu0 0
          %809 = vmatpush1.bf16.msra.mxu0 %v786
          %810 = vmatprep.subr.bf16.mxu0 0
          %811 = vmatpush1.bf16.msra.mxu0 %v787
          %812 = vmatprep.subr.bf16.mxu0 0
          %813 = vmatpush1.bf16.msra.mxu0 0
          %814 = vmatprep.subr.bf16.mxu0 0
          %815 = vmatpush1.bf16.msra.mxu0 0
          %816 = vmatprep.subr.bf16.mxu0 0
          %817 = vmatpush1.bf16.msra.mxu0 0
          %818 = vmatprep.subr.bf16.mxu0 0
          %819 = vmatpush1.bf16.msra.mxu0 0
          %820 = vmatprep.subr.bf16.mxu0 0
          %821 = vmatpush1.bf16.msra.mxu0 0
          %822 = vmatprep.subr.bf16.mxu0 0
          %823 = vmatpush1.bf16.msra.mxu0 0
          %824 = vmatprep.subr.bf16.mxu0 0
          %825 = vmatpush1.bf16.msra.mxu0 0
          %826 = vmatprep.subr.bf16.mxu0 0
          %827 = vmatpush1.bf16.msra.mxu0 0
          %828 = vmatprep.mubr.bf16.mxu0 0
          %829 = vmatmul.mubr.bf16.gmra.mrb[0].mxu0 %v740
          %v830 = vpop.f32.mrb[0].mxu0
          %v831 = vadd.f32 0.0, %v830
          %v832 = vpop.f32.mrb[0].mxu0
          %v833 = vpop.f32.mrb[0].mxu0
          %v834 = vadd.f32 0.0, %v833
          %v835 = vpop.f32.mrb[0].mxu0
          %836 = vmatprep.mubr.bf16.mxu0 0
          %837 = vmatmul.mubr.bf16.gmra.mrb[0].mxu0 %v741
          %v838 = vpop.f32.mrb[0].mxu0
          %v839 = vadd.f32 0.0, %v838
          %v840 = vpop.f32.mrb[0].mxu0
          %v841 = vpop.f32.mrb[0].mxu0
          %v842 = vadd.f32 0.0, %v841
          %v843 = vpop.f32.mrb[0].mxu0
          %844 = vmatprep.mubr.bf16.mxu0 0
          %845 = vmatmul.mubr.bf16.gmra.mrb[0].mxu0 %v742
          %v846 = vpop.f32.mrb[0].mxu0
          %v847 = vadd.f32 0.0, %v846
          %v848 = vpop.f32.mrb[0].mxu0
          %v849 = vpop.f32.mrb[0].mxu0
          %v850 = vadd.f32 0.0, %v849
          %v851 = vpop.f32.mrb[0].mxu0
          %852 = vmatprep.mubr.bf16.mxu0 0
          %853 = vmatmul.mubr.bf16.gmra.mrb[0].mxu0 %v743
          %v854 = vpop.f32.mrb[0].mxu0
          %v855 = vadd.f32 0.0, %v854
          %v856 = vpop.f32.mrb[0].mxu0
          %v857 = vpop.f32.mrb[0].mxu0
          %v858 = vadd.f32 0.0, %v857
          %v859 = vpop.f32.mrb[0].mxu0
          %860 = vmatprep.mubr.bf16.mxu0 0
          %861 = vmatmul.mubr.bf16.gmra.mrb[0].mxu0 %v744
          %v862 = vpop.f32.mrb[0].mxu0
          %v863 = vadd.f32 0.0, %v862
          %v864 = vpop.f32.mrb[0].mxu0
          %v865 = vpop.f32.mrb[0].mxu0
          %v866 = vadd.f32 0.0, %v865
          %v867 = vpop.f32.mrb[0].mxu0
          %868 = vmatprep.mubr.bf16.mxu0 0
          %869 = vmatmul.mubr.bf16.gmra.mrb[0].mxu0 %v745
          %v870 = vpop.f32.mrb[0].mxu0
          %v871 = vadd.f32 0.0, %v870
          %v872 = vpop.f32.mrb[0].mxu0
          %v873 = vpop.f32.mrb[0].mxu0
          %v874 = vadd.f32 0.0, %v873
          %v875 = vpop.f32.mrb[0].mxu0
          %876 = vmatprep.mubr.bf16.mxu0 0
          %877 = vmatmul.mubr.bf16.gmra.mrb[0].mxu0 %v746
          %v878 = vpop.f32.mrb[0].mxu0
          %v879 = vadd.f32 0.0, %v878
          %v880 = vpop.f32.mrb[0].mxu0
          %v881 = vpop.f32.mrb[0].mxu0
          %v882 = vadd.f32 0.0, %v881
          %v883 = vpop.f32.mrb[0].mxu0
          %884 = vmatprep.mubr.bf16.mxu0 0
          %885 = vmatmul.mubr.bf16.gmra.mrb[0].mxu0 %v747
          %v886 = vpop.f32.mrb[0].mxu0
          %v887 = vadd.f32 0.0, %v886
          %v888 = vpop.f32.mrb[0].mxu0
          %v889 = vpop.f32.mrb[0].mxu0
          %v890 = vadd.f32 0.0, %v889
          %v891 = vpop.f32.mrb[0].mxu0
          %892 = vdwg.mxu0
          %v909 = vunpack.c.l.b16 %v724
          %v910 = vunpack.c.l.b16 %v725
          %v911 = vunpack.c.l.b16 %v726
          %v912 = vunpack.c.l.b16 %v727
          %v913 = vunpack.c.l.b16 %v728
          %v914 = vunpack.c.l.b16 %v729
          %v915 = vunpack.c.l.b16 %v730
          %v916 = vunpack.c.l.b16 %v731
          %v917 = vunpack.c.l.b16 %v732
          %v918 = vunpack.c.l.b16 %v733
          %v919 = vunpack.c.l.b16 %v734
          %v920 = vunpack.c.l.b16 %v735
          %v921 = vunpack.c.l.b16 %v736
          %v922 = vunpack.c.l.b16 %v737
          %v923 = vunpack.c.l.b16 %v738
          %v924 = vunpack.c.l.b16 %v739
          %v925 = vpack.c.b16 %v910, %v909
          %v926 = vpack.c.b16 %v912, %v911
          %v927 = vpack.c.b16 %v914, %v913
          %v928 = vpack.c.b16 %v916, %v915
          %v929 = vpack.c.b16 %v918, %v917
          %v930 = vpack.c.b16 %v920, %v919
          %v931 = vpack.c.b16 %v922, %v921
          %v932 = vpack.c.b16 %v924, %v923
          %v957 = vunpack.c.l.b16 %v473
          %v958 = vunpack.c.l.b16 %v474
          %v959 = vunpack.c.l.b16 %v475
          %v960 = vunpack.c.l.b16 %v476
          %v961 = vunpack.c.l.b16 %v477
          %v962 = vunpack.c.l.b16 %v478
          %v963 = vunpack.c.l.b16 %v479
          %v964 = vunpack.c.l.b16 %v480
          %v965 = vunpack.c.l.b16 %v481
          %v966 = vunpack.c.l.b16 %v482
          %v967 = vunpack.c.l.b16 %v483
          %v968 = vunpack.c.l.b16 %v484
          %v969 = vunpack.c.l.b16 %v485
          %v970 = vunpack.c.l.b16 %v486
          %v971 = vunpack.c.l.b16 %v487
          %v972 = vunpack.c.l.b16 %v488
          %v973 = vpack.c.b16 %v958, %v957
          %v974 = vpack.c.b16 %v960, %v959
          %v975 = vpack.c.b16 %v962, %v961
          %v976 = vpack.c.b16 %v964, %v963
          %v977 = vpack.c.b16 %v966, %v965
          %v978 = vpack.c.b16 %v968, %v967
          %v979 = vpack.c.b16 %v970, %v969
          %v980 = vpack.c.b16 %v972, %v971
          %989 = vmatprep.subr.bf16.mxu0 0
          %990 = vmatpush1.bf16.msra.mxu0 %v973
          %991 = vmatprep.subr.bf16.mxu0 0
          %992 = vmatpush1.bf16.msra.mxu0 %v974
          %993 = vmatprep.subr.bf16.mxu0 0
          %994 = vmatpush1.bf16.msra.mxu0 %v975
          %995 = vmatprep.subr.bf16.mxu0 0
          %996 = vmatpush1.bf16.msra.mxu0 %v976
          %997 = vmatprep.subr.bf16.mxu0 0
          %998 = vmatpush1.bf16.msra.mxu0 %v977
          %999 = vmatprep.subr.bf16.mxu0 0
          %1000 = vmatpush1.bf16.msra.mxu0 %v978
          %1001 = vmatprep.subr.bf16.mxu0 0
          %1002 = vmatpush1.bf16.msra.mxu0 %v979
          %1003 = vmatprep.subr.bf16.mxu0 0
          %1004 = vmatpush1.bf16.msra.mxu0 %v980
          %1005 = vmatprep.subr.bf16.mxu0 0
          %1006 = vmatpush1.bf16.msra.mxu0 0
          %1007 = vmatprep.subr.bf16.mxu0 0
          %1008 = vmatpush1.bf16.msra.mxu0 0
          %1009 = vmatprep.subr.bf16.mxu0 0
          %1010 = vmatpush1.bf16.msra.mxu0 0
          %1011 = vmatprep.subr.bf16.mxu0 0
          %1012 = vmatpush1.bf16.msra.mxu0 0
          %1013 = vmatprep.subr.bf16.mxu0 0
          %1014 = vmatpush1.bf16.msra.mxu0 0
          %1015 = vmatprep.subr.bf16.mxu0 0
          %1016 = vmatpush1.bf16.msra.mxu0 0
          %1017 = vmatprep.subr.bf16.mxu0 0
          %1018 = vmatpush1.bf16.msra.mxu0 0
          %1019 = vmatprep.subr.bf16.mxu0 0
          %1020 = vmatpush1.bf16.msra.mxu0 0
          %1021 = vmatprep.mubr.bf16.mxu0 0
          %1022 = vmatmul.mubr.bf16.gmra.mrb[0].mxu0 %v925
          %v1023 = vpop.f32.mrb[0].mxu0
          %v1024 = vadd.f32 %v831, %v1023
          %v1025 = vpop.f32.mrb[0].mxu0
          %v1026 = vpop.f32.mrb[0].mxu0
          %v1027 = vadd.f32 %v834, %v1026
          %v1028 = vpop.f32.mrb[0].mxu0
          %1029 = vmatprep.mubr.bf16.mxu0 0
          %1030 = vmatmul.mubr.bf16.gmra.mrb[0].mxu0 %v926
          %v1031 = vpop.f32.mrb[0].mxu0
          %v1032 = vadd.f32 %v839, %v1031
          %v1033 = vpop.f32.mrb[0].mxu0
          %v1034 = vpop.f32.mrb[0].mxu0
          %v1035 = vadd.f32 %v842, %v1034
          %v1036 = vpop.f32.mrb[0].mxu0
          %1037 = vmatprep.mubr.bf16.mxu0 0
          %1038 = vmatmul.mubr.bf16.gmra.mrb[0].mxu0 %v927
          %v1039 = vpop.f32.mrb[0].mxu0
          %v1040 = vadd.f32 %v847, %v1039
          %v1041 = vpop.f32.mrb[0].mxu0
          %v1042 = vpop.f32.mrb[0].mxu0
          %v1043 = vadd.f32 %v850, %v1042
          %v1044 = vpop.f32.mrb[0].mxu0
          %1045 = vmatprep.mubr.bf16.mxu0 0
          %1046 = vmatmul.mubr.bf16.gmra.mrb[0].mxu0 %v928
          %v1047 = vpop.f32.mrb[0].mxu0
          %v1048 = vadd.f32 %v855, %v1047
          %v1049 = vpop.f32.mrb[0].mxu0
          %v1050 = vpop.f32.mrb[0].mxu0
          %v1051 = vadd.f32 %v858, %v1050
          %v1052 = vpop.f32.mrb[0].mxu0
          %1053 = vmatprep.mubr.bf16.mxu0 0
          %1054 = vmatmul.mubr.bf16.gmra.mrb[0].mxu0 %v929
          %v1055 = vpop.f32.mrb[0].mxu0
          %v1056 = vadd.f32 %v863, %v1055
          %v1057 = vpop.f32.mrb[0].mxu0
          %v1058 = vpop.f32.mrb[0].mxu0
          %v1059 = vadd.f32 %v866, %v1058
          %v1060 = vpop.f32.mrb[0].mxu0
          %1061 = vmatprep.mubr.bf16.mxu0 0
          %1062 = vmatmul.mubr.bf16.gmra.mrb[0].mxu0 %v930
          %v1063 = vpop.f32.mrb[0].mxu0
          %v1064 = vadd.f32 %v871, %v1063
          %v1065 = vpop.f32.mrb[0].mxu0
          %v1066 = vpop.f32.mrb[0].mxu0
          %v1067 = vadd.f32 %v874, %v1066
          %v1068 = vpop.f32.mrb[0].mxu0
          %1069 = vmatprep.mubr.bf16.mxu0 0
          %1070 = vmatmul.mubr.bf16.gmra.mrb[0].mxu0 %v931
          %v1071 = vpop.f32.mrb[0].mxu0
          %v1072 = vadd.f32 %v879, %v1071
          %v1073 = vpop.f32.mrb[0].mxu0
          %v1074 = vpop.f32.mrb[0].mxu0
          %v1075 = vadd.f32 %v882, %v1074
          %v1076 = vpop.f32.mrb[0].mxu0
          %1077 = vmatprep.mubr.bf16.mxu0 0
          %1078 = vmatmul.mubr.bf16.gmra.mrb[0].mxu0 %v932
          %v1079 = vpop.f32.mrb[0].mxu0
          %v1080 = vadd.f32 %v887, %v1079
          %v1081 = vpop.f32.mrb[0].mxu0
          %v1082 = vpop.f32.mrb[0].mxu0
          %v1083 = vadd.f32 %v890, %v1082
          %v1084 = vpop.f32.mrb[0].mxu0
          %1085 = vdwg.mxu0
          %v1087 = vlaneseq
          %v1088 = vshrl.u32 %v1087, 7
          %v1089 = vsub.s32 0, %v1088
          %v1090 = vrot.slane %v506, %v1089
          %v1092 = vadd.f32 %v1024, %v1090
          %v1093 = vadd.f32 %v1027, %v1090
          %v1094 = vadd.f32 %v1032, %v1090
          %v1095 = vadd.f32 %v1035, %v1090
          %v1096 = vadd.f32 %v1040, %v1090
          %v1097 = vadd.f32 %v1043, %v1090
          %v1098 = vadd.f32 %v1048, %v1090
          %v1099 = vadd.f32 %v1051, %v1090
          %v1100 = vadd.f32 %v1056, %v1090
          %v1101 = vadd.f32 %v1059, %v1090
          %v1102 = vadd.f32 %v1064, %v1090
          %v1103 = vadd.f32 %v1067, %v1090
          %v1104 = vadd.f32 %v1072, %v1090
          %v1105 = vadd.f32 %v1075, %v1090
          %v1106 = vadd.f32 %v1080, %v1090
          %v1107 = vadd.f32 %v1083, %v1090
          %vm1108 = vcmp.ge.f32.partialorder %v1092, 0.0
          %vm1109 = vcmp.ge.f32.partialorder %v1093, 0.0
          %vm1110 = vcmp.ge.f32.partialorder %v1094, 0.0
          %vm1111 = vcmp.ge.f32.partialorder %v1095, 0.0
          %vm1112 = vcmp.ge.f32.partialorder %v1096, 0.0
          %vm1113 = vcmp.ge.f32.partialorder %v1097, 0.0
          %vm1114 = vcmp.ge.f32.partialorder %v1098, 0.0
          %vm1115 = vcmp.ge.f32.partialorder %v1099, 0.0
          %vm1116 = vcmp.ge.f32.partialorder %v1100, 0.0
          %vm1117 = vcmp.ge.f32.partialorder %v1101, 0.0
          %vm1118 = vcmp.ge.f32.partialorder %v1102, 0.0
          %vm1119 = vcmp.ge.f32.partialorder %v1103, 0.0
          %vm1120 = vcmp.ge.f32.partialorder %v1104, 0.0
          %vm1121 = vcmp.ge.f32.partialorder %v1105, 0.0
          %vm1122 = vcmp.ge.f32.partialorder %v1106, 0.0
          %vm1123 = vcmp.ge.f32.partialorder %v1107, 0.0
          %v1124 = vstv %s508
          %v1125 = vmul.f32 %v1124, %v1092
          %v1126 = vmul.f32 %v1124, %v1093
          %v1127 = vmul.f32 %v1124, %v1094
          %v1128 = vmul.f32 %v1124, %v1095
          %v1129 = vmul.f32 %v1124, %v1096
          %v1130 = vmul.f32 %v1124, %v1097
          %v1131 = vmul.f32 %v1124, %v1098
          %v1132 = vmul.f32 %v1124, %v1099
          %v1133 = vmul.f32 %v1124, %v1100
          %v1134 = vmul.f32 %v1124, %v1101
          %v1135 = vmul.f32 %v1124, %v1102
          %v1136 = vmul.f32 %v1124, %v1103
          %v1137 = vmul.f32 %v1124, %v1104
          %v1138 = vmul.f32 %v1124, %v1105
          %v1139 = vmul.f32 %v1124, %v1106
          %v1140 = vmul.f32 %v1124, %v1107
          %v1141 = vsel %vm1108, %v1092, %v1125
          %v1142 = vsel %vm1109, %v1093, %v1126
          %v1143 = vsel %vm1110, %v1094, %v1127
          %v1144 = vsel %vm1111, %v1095, %v1128
          %v1145 = vsel %vm1112, %v1096, %v1129
          %v1146 = vsel %vm1113, %v1097, %v1130
          %v1147 = vsel %vm1114, %v1098, %v1131
          %v1148 = vsel %vm1115, %v1099, %v1132
          %v1149 = vsel %vm1116, %v1100, %v1133
          %v1150 = vsel %vm1117, %v1101, %v1134
          %v1151 = vsel %vm1118, %v1102, %v1135
          %v1152 = vsel %vm1119, %v1103, %v1136
          %v1153 = vsel %vm1120, %v1104, %v1137
          %v1154 = vsel %vm1121, %v1105, %v1138
          %v1155 = vsel %vm1122, %v1106, %v1139
          %v1156 = vsel %vm1123, %v1107, %v1140
          %v1157 = vpack.c.bf16 %v1142, %v1141
          %v1158 = vpack.c.bf16 %v1144, %v1143
          %v1159 = vpack.c.bf16 %v1146, %v1145
          %v1160 = vpack.c.bf16 %v1148, %v1147
          %v1161 = vpack.c.bf16 %v1150, %v1149
          %v1162 = vpack.c.bf16 %v1152, %v1151
          %v1163 = vpack.c.bf16 %v1154, %v1153
          %v1164 = vpack.c.bf16 %v1156, %v1155
          %s1165 = sshra.s32 %s452, 4
          %s1166 = sand.u32 %s452, 15
          %s1167 = smul.addr %s1165, 8
          %s1168 = scalar_lea.vmem [#allocation3], %s1167
          %1169 = vst [vmem:[%s1168] sm:$0xff] %v1157
          %1170 = vst [vmem:[%s1168 + $0x8] sm:$0xff] %v1158
          %1171 = vst [vmem:[%s1168 + $0x10] sm:$0xff] %v1159
          %1172 = vst [vmem:[%s1168 + $0x18] sm:$0xff] %v1160
          %1173 = vst [vmem:[%s1168 + $0x20] sm:$0xff] %v1161
          %1174 = vst [vmem:[%s1168 + $0x28] sm:$0xff] %v1162
          %1175 = vst [vmem:[%s1168 + $0x30] sm:$0xff] %v1163
          %1176 = vst [vmem:[%s1168 + $0x38] sm:$0xff] %v1164
        $region72: #{run_forward.1} parent=51 // pred_fallthru
          _
        %p1177 = scmp.gt.s32.totalorder %s34, 0
        %p1178 = scmp.lt.s32.totalorder %s34, 0
        %s1179 = ssub.s32 0, %s34
        %s1180 = scalar_select %p1178, %s1179, %s34
        %s1181 = sand.u32 %s1180, 1
        %s1182 = ssub.s32 0, %s1181
        %s1183 = scalar_select %p1178, %s1182, %s1181
        %p1184 = scmp.ne.s32.totalorder %s1183, 0
        %p1185 = scmp.lt.s32.totalorder %s1183, 0
        %p1186 = pnand %p1185, %p1184
        %p1187 = pneg %p1186
        %s1188 = sadd.s32 %s1183, 2
        %s1189 = scalar_select %p1187, %s1188, %s1183
        %p1190 = scmp.eq.s32.totalorder %s1189, 1
        %p1191 = pnand %p1177, %p1190
        %p1192 = pneg %p1191
        // Predicated region
        $region73: #{run_forward.1} parent=51 // pred_check
          _
        $region74: #{run_forward.1} parent=51 // pred_check_branch
          %1194 = sbr.rel (%p1191) target = $region76
        $region75: #{run_forward.1} parent=51 // pred_region
          %v1195 = vld [vmem:[#allocation3] sm:$0xff]
          %v1196 = vld [vmem:[#allocation3 + $0x8] sm:$0xff]
          %v1197 = vld [vmem:[#allocation3 + $0x10] sm:$0xff]
          %v1198 = vld [vmem:[#allocation3 + $0x18] sm:$0xff]
          %v1199 = vld [vmem:[#allocation3 + $0x20] sm:$0xff]
          %v1200 = vld [vmem:[#allocation3 + $0x28] sm:$0xff]
          %v1201 = vld [vmem:[#allocation3 + $0x30] sm:$0xff]
          %v1202 = vld [vmem:[#allocation3 + $0x38] sm:$0xff]
          %v1219 = vunpack.c.l.b16 %v457
          %v1220 = vunpack.c.l.b16 %v458
          %v1221 = vunpack.c.l.b16 %v459
          %v1222 = vunpack.c.l.b16 %v460
          %v1223 = vunpack.c.l.b16 %v461
          %v1224 = vunpack.c.l.b16 %v462
          %v1225 = vunpack.c.l.b16 %v463
          %v1226 = vunpack.c.l.b16 %v464
          %v1227 = vunpack.c.l.b16 %v465
          %v1228 = vunpack.c.l.b16 %v466
          %v1229 = vunpack.c.l.b16 %v467
          %v1230 = vunpack.c.l.b16 %v468
          %v1231 = vunpack.c.l.b16 %v469
          %v1232 = vunpack.c.l.b16 %v470
          %v1233 = vunpack.c.l.b16 %v471
          %v1234 = vunpack.c.l.b16 %v472
          %v1235 = vpack.c.b16 %v1220, %v1219
          %v1236 = vpack.c.b16 %v1222, %v1221
          %v1237 = vpack.c.b16 %v1224, %v1223
          %v1238 = vpack.c.b16 %v1226, %v1225
          %v1239 = vpack.c.b16 %v1228, %v1227
          %v1240 = vpack.c.b16 %v1230, %v1229
          %v1241 = vpack.c.b16 %v1232, %v1231
          %v1242 = vpack.c.b16 %v1234, %v1233
          %1251 = vmatprep.subr.bf16.mxu0 0
          %1252 = vmatpush1.bf16.msra.mxu0 %v1195
          %1253 = vmatprep.subr.bf16.mxu0 0
          %1254 = vmatpush1.bf16.msra.mxu0 %v1196
          %1255 = vmatprep.subr.bf16.mxu0 0
          %1256 = vmatpush1.bf16.msra.mxu0 %v1197
          %1257 = vmatprep.subr.bf16.mxu0 0
          %1258 = vmatpush1.bf16.msra.mxu0 %v1198
          %1259 = vmatprep.subr.bf16.mxu0 0
          %1260 = vmatpush1.bf16.msra.mxu0 %v1199
          %1261 = vmatprep.subr.bf16.mxu0 0
          %1262 = vmatpush1.bf16.msra.mxu0 %v1200
          %1263 = vmatprep.subr.bf16.mxu0 0
          %1264 = vmatpush1.bf16.msra.mxu0 %v1201
          %1265 = vmatprep.subr.bf16.mxu0 0
          %1266 = vmatpush1.bf16.msra.mxu0 %v1202
          %1267 = vmatprep.subr.bf16.mxu0 0
          %1268 = vmatpush1.bf16.msra.mxu0 0
          %1269 = vmatprep.subr.bf16.mxu0 0
          %1270 = vmatpush1.bf16.msra.mxu0 0
          %1271 = vmatprep.subr.bf16.mxu0 0
          %1272 = vmatpush1.bf16.msra.mxu0 0
          %1273 = vmatprep.subr.bf16.mxu0 0
          %1274 = vmatpush1.bf16.msra.mxu0 0
          %1275 = vmatprep.subr.bf16.mxu0 0
          %1276 = vmatpush1.bf16.msra.mxu0 0
          %1277 = vmatprep.subr.bf16.mxu0 0
          %1278 = vmatpush1.bf16.msra.mxu0 0
          %1279 = vmatprep.subr.bf16.mxu0 0
          %1280 = vmatpush1.bf16.msra.mxu0 0
          %1281 = vmatprep.subr.bf16.mxu0 0
          %1282 = vmatpush1.bf16.msra.mxu0 0
          %1283 = vmatprep.mubr.bf16.mxu0 0
          %1284 = vmatmul.mubr.bf16.gmra.mrb[0].mxu0 %v1235
          %v1285 = vpop.f32.mrb[0].mxu0
          %v1286 = vadd.f32 0.0, %v1285
          %v1287 = vpop.f32.mrb[0].mxu0
          %v1288 = vpop.f32.mrb[0].mxu0
          %v1289 = vadd.f32 0.0, %v1288
          %v1290 = vpop.f32.mrb[0].mxu0
          %1291 = vmatprep.mubr.bf16.mxu0 0
          %1292 = vmatmul.mubr.bf16.gmra.mrb[0].mxu0 %v1236
          %v1293 = vpop.f32.mrb[0].mxu0
          %v1294 = vadd.f32 0.0, %v1293
          %v1295 = vpop.f32.mrb[0].mxu0
          %v1296 = vpop.f32.mrb[0].mxu0
          %v1297 = vadd.f32 0.0, %v1296
          %v1298 = vpop.f32.mrb[0].mxu0
          %1299 = vmatprep.mubr.bf16.mxu0 0
          %1300 = vmatmul.mubr.bf16.gmra.mrb[0].mxu0 %v1237
          %v1301 = vpop.f32.mrb[0].mxu0
          %v1302 = vadd.f32 0.0, %v1301
          %v1303 = vpop.f32.mrb[0].mxu0
          %v1304 = vpop.f32.mrb[0].mxu0
          %v1305 = vadd.f32 0.0, %v1304
          %v1306 = vpop.f32.mrb[0].mxu0
          %1307 = vmatprep.mubr.bf16.mxu0 0
          %1308 = vmatmul.mubr.bf16.gmra.mrb[0].mxu0 %v1238
          %v1309 = vpop.f32.mrb[0].mxu0
          %v1310 = vadd.f32 0.0, %v1309
          %v1311 = vpop.f32.mrb[0].mxu0
          %v1312 = vpop.f32.mrb[0].mxu0
          %v1313 = vadd.f32 0.0, %v1312
          %v1314 = vpop.f32.mrb[0].mxu0
          %1315 = vmatprep.mubr.bf16.mxu0 0
          %1316 = vmatmul.mubr.bf16.gmra.mrb[0].mxu0 %v1239
          %v1317 = vpop.f32.mrb[0].mxu0
          %v1318 = vadd.f32 0.0, %v1317
          %v1319 = vpop.f32.mrb[0].mxu0
          %v1320 = vpop.f32.mrb[0].mxu0
          %v1321 = vadd.f32 0.0, %v1320
          %v1322 = vpop.f32.mrb[0].mxu0
          %1323 = vmatprep.mubr.bf16.mxu0 0
          %1324 = vmatmul.mubr.bf16.gmra.mrb[0].mxu0 %v1240
          %v1325 = vpop.f32.mrb[0].mxu0
          %v1326 = vadd.f32 0.0, %v1325
          %v1327 = vpop.f32.mrb[0].mxu0
          %v1328 = vpop.f32.mrb[0].mxu0
          %v1329 = vadd.f32 0.0, %v1328
          %v1330 = vpop.f32.mrb[0].mxu0
          %1331 = vmatprep.mubr.bf16.mxu0 0
          %1332 = vmatmul.mubr.bf16.gmra.mrb[0].mxu0 %v1241
          %v1333 = vpop.f32.mrb[0].mxu0
          %v1334 = vadd.f32 0.0, %v1333
          %v1335 = vpop.f32.mrb[0].mxu0
          %v1336 = vpop.f32.mrb[0].mxu0
          %v1337 = vadd.f32 0.0, %v1336
          %v1338 = vpop.f32.mrb[0].mxu0
          %1339 = vmatprep.mubr.bf16.mxu0 0
          %1340 = vmatmul.mubr.bf16.gmra.mrb[0].mxu0 %v1242
          %v1341 = vpop.f32.mrb[0].mxu0
          %v1342 = vadd.f32 0.0, %v1341
          %v1343 = vpop.f32.mrb[0].mxu0
          %v1344 = vpop.f32.mrb[0].mxu0
          %v1345 = vadd.f32 0.0, %v1344
          %v1346 = vpop.f32.mrb[0].mxu0
          %1347 = vdwg.mxu0
          %s1348 = sshra.s32 %s452, 4
          %s1349 = sand.u32 %s452, 15
          %s1350 = smul.addr %s1348, 8
          %s1351 = scalar_lea.vmem [#allocation3], %s1350
          %v1352 = vld [vmem:[%s1351] sm:$0xff]
          %v1353 = vld [vmem:[%s1351 + $0x8] sm:$0xff]
          %v1354 = vld [vmem:[%s1351 + $0x10] sm:$0xff]
          %v1355 = vld [vmem:[%s1351 + $0x18] sm:$0xff]
          %v1356 = vld [vmem:[%s1351 + $0x20] sm:$0xff]
          %v1357 = vld [vmem:[%s1351 + $0x28] sm:$0xff]
          %v1358 = vld [vmem:[%s1351 + $0x30] sm:$0xff]
          %v1359 = vld [vmem:[%s1351 + $0x38] sm:$0xff]
          %v1360 = vpack.c.bf16 %v1289, %v1286
          %v1361 = vpack.c.bf16 %v1297, %v1294
          %v1362 = vpack.c.bf16 %v1305, %v1302
          %v1363 = vpack.c.bf16 %v1313, %v1310
          %v1364 = vpack.c.bf16 %v1321, %v1318
          %v1365 = vpack.c.bf16 %v1329, %v1326
          %v1366 = vpack.c.bf16 %v1337, %v1334
          %v1367 = vpack.c.bf16 %v1345, %v1342
          %v1384 = vunpack.c.l.b16 %v490
          %v1385 = vunpack.c.l.b16 %v491
          %v1386 = vunpack.c.l.b16 %v492
          %v1387 = vunpack.c.l.b16 %v493
          %v1388 = vunpack.c.l.b16 %v494
          %v1389 = vunpack.c.l.b16 %v495
          %v1390 = vunpack.c.l.b16 %v496
          %v1391 = vunpack.c.l.b16 %v497
          %v1392 = vunpack.c.l.b16 %v498
          %v1393 = vunpack.c.l.b16 %v499
          %v1394 = vunpack.c.l.b16 %v500
          %v1395 = vunpack.c.l.b16 %v501
          %v1396 = vunpack.c.l.b16 %v502
          %v1397 = vunpack.c.l.b16 %v503
          %v1398 = vunpack.c.l.b16 %v504
          %v1399 = vunpack.c.l.b16 %v505
          %v1400 = vpack.c.b16 %v1385, %v1384
          %v1401 = vpack.c.b16 %v1387, %v1386
          %v1402 = vpack.c.b16 %v1389, %v1388
          %v1403 = vpack.c.b16 %v1391, %v1390
          %v1404 = vpack.c.b16 %v1393, %v1392
          %v1405 = vpack.c.b16 %v1395, %v1394
          %v1406 = vpack.c.b16 %v1397, %v1396
          %v1407 = vpack.c.b16 %v1399, %v1398
          %1416 = vmatprep.subr.bf16.mxu0 0
          %1417 = vmatpush1.bf16.msra.mxu0 %v1400
          %1418 = vmatprep.subr.bf16.mxu0 0
          %1419 = vmatpush1.bf16.msra.mxu0 %v1401
          %1420 = vmatprep.subr.bf16.mxu0 0
          %1421 = vmatpush1.bf16.msra.mxu0 %v1402
          %1422 = vmatprep.subr.bf16.mxu0 0
          %1423 = vmatpush1.bf16.msra.mxu0 %v1403
          %1424 = vmatprep.subr.bf16.mxu0 0
          %1425 = vmatpush1.bf16.msra.mxu0 %v1404
          %1426 = vmatprep.subr.bf16.mxu0 0
          %1427 = vmatpush1.bf16.msra.mxu0 %v1405
          %1428 = vmatprep.subr.bf16.mxu0 0
          %1429 = vmatpush1.bf16.msra.mxu0 %v1406
          %1430 = vmatprep.subr.bf16.mxu0 0
          %1431 = vmatpush1.bf16.msra.mxu0 %v1407
          %1432 = vmatprep.subr.bf16.mxu0 0
          %1433 = vmatpush1.bf16.msra.mxu0 0
          %1434 = vmatprep.subr.bf16.mxu0 0
          %1435 = vmatpush1.bf16.msra.mxu0 0
          %1436 = vmatprep.subr.bf16.mxu0 0
          %1437 = vmatpush1.bf16.msra.mxu0 0
          %1438 = vmatprep.subr.bf16.mxu0 0
          %1439 = vmatpush1.bf16.msra.mxu0 0
          %1440 = vmatprep.subr.bf16.mxu0 0
          %1441 = vmatpush1.bf16.msra.mxu0 0
          %1442 = vmatprep.subr.bf16.mxu0 0
          %1443 = vmatpush1.bf16.msra.mxu0 0
          %1444 = vmatprep.subr.bf16.mxu0 0
          %1445 = vmatpush1.bf16.msra.mxu0 0
          %1446 = vmatprep.subr.bf16.mxu0 0
          %1447 = vmatpush1.bf16.msra.mxu0 0
          %1448 = vmatprep.mubr.bf16.mxu0 0
          %1449 = vmatmul.mubr.bf16.gmra.mrb[0].mxu0 %v1360
          %v1450 = vpop.f32.mrb[0].mxu0
          %v1451 = vadd.f32 0.0, %v1450
          %v1452 = vpop.f32.mrb[0].mxu0
          %v1453 = vpop.f32.mrb[0].mxu0
          %v1454 = vadd.f32 0.0, %v1453
          %v1455 = vpop.f32.mrb[0].mxu0
          %1456 = vmatprep.mubr.bf16.mxu0 0
          %1457 = vmatmul.mubr.bf16.gmra.mrb[0].mxu0 %v1361
          %v1458 = vpop.f32.mrb[0].mxu0
          %v1459 = vadd.f32 0.0, %v1458
          %v1460 = vpop.f32.mrb[0].mxu0
          %v1461 = vpop.f32.mrb[0].mxu0
          %v1462 = vadd.f32 0.0, %v1461
          %v1463 = vpop.f32.mrb[0].mxu0
          %1464 = vmatprep.mubr.bf16.mxu0 0
          %1465 = vmatmul.mubr.bf16.gmra.mrb[0].mxu0 %v1362
          %v1466 = vpop.f32.mrb[0].mxu0
          %v1467 = vadd.f32 0.0, %v1466
          %v1468 = vpop.f32.mrb[0].mxu0
          %v1469 = vpop.f32.mrb[0].mxu0
          %v1470 = vadd.f32 0.0, %v1469
          %v1471 = vpop.f32.mrb[0].mxu0
          %1472 = vmatprep.mubr.bf16.mxu0 0
          %1473 = vmatmul.mubr.bf16.gmra.mrb[0].mxu0 %v1363
          %v1474 = vpop.f32.mrb[0].mxu0
          %v1475 = vadd.f32 0.0, %v1474
          %v1476 = vpop.f32.mrb[0].mxu0
          %v1477 = vpop.f32.mrb[0].mxu0
          %v1478 = vadd.f32 0.0, %v1477
          %v1479 = vpop.f32.mrb[0].mxu0
          %1480 = vmatprep.mubr.bf16.mxu0 0
          %1481 = vmatmul.mubr.bf16.gmra.mrb[0].mxu0 %v1364
          %v1482 = vpop.f32.mrb[0].mxu0
          %v1483 = vadd.f32 0.0, %v1482
          %v1484 = vpop.f32.mrb[0].mxu0
          %v1485 = vpop.f32.mrb[0].mxu0
          %v1486 = vadd.f32 0.0, %v1485
          %v1487 = vpop.f32.mrb[0].mxu0
          %1488 = vmatprep.mubr.bf16.mxu0 0
          %1489 = vmatmul.mubr.bf16.gmra.mrb[0].mxu0 %v1365
          %v1490 = vpop.f32.mrb[0].mxu0
          %v1491 = vadd.f32 0.0, %v1490
          %v1492 = vpop.f32.mrb[0].mxu0
          %v1493 = vpop.f32.mrb[0].mxu0
          %v1494 = vadd.f32 0.0, %v1493
          %v1495 = vpop.f32.mrb[0].mxu0
          %1496 = vmatprep.mubr.bf16.mxu0 0
          %1497 = vmatmul.mubr.bf16.gmra.mrb[0].mxu0 %v1366
          %v1498 = vpop.f32.mrb[0].mxu0
          %v1499 = vadd.f32 0.0, %v1498
          %v1500 = vpop.f32.mrb[0].mxu0
          %v1501 = vpop.f32.mrb[0].mxu0
          %v1502 = vadd.f32 0.0, %v1501
          %v1503 = vpop.f32.mrb[0].mxu0
          %1504 = vmatprep.mubr.bf16.mxu0 0
          %1505 = vmatmul.mubr.bf16.gmra.mrb[0].mxu0 %v1367
          %v1506 = vpop.f32.mrb[0].mxu0
          %v1507 = vadd.f32 0.0, %v1506
          %v1508 = vpop.f32.mrb[0].mxu0
          %v1509 = vpop.f32.mrb[0].mxu0
          %v1510 = vadd.f32 0.0, %v1509
          %v1511 = vpop.f32.mrb[0].mxu0
          %1512 = vdwg.mxu0
          %v1529 = vunpack.c.l.b16 %v473
          %v1530 = vunpack.c.l.b16 %v474
          %v1531 = vunpack.c.l.b16 %v475
          %v1532 = vunpack.c.l.b16 %v476
          %v1533 = vunpack.c.l.b16 %v477
          %v1534 = vunpack.c.l.b16 %v478
          %v1535 = vunpack.c.l.b16 %v479
          %v1536 = vunpack.c.l.b16 %v480
          %v1537 = vunpack.c.l.b16 %v481
          %v1538 = vunpack.c.l.b16 %v482
          %v1539 = vunpack.c.l.b16 %v483
          %v1540 = vunpack.c.l.b16 %v484
          %v1541 = vunpack.c.l.b16 %v485
          %v1542 = vunpack.c.l.b16 %v486
          %v1543 = vunpack.c.l.b16 %v487
          %v1544 = vunpack.c.l.b16 %v488
          %v1545 = vpack.c.b16 %v1530, %v1529
          %v1546 = vpack.c.b16 %v1532, %v1531
          %v1547 = vpack.c.b16 %v1534, %v1533
          %v1548 = vpack.c.b16 %v1536, %v1535
          %v1549 = vpack.c.b16 %v1538, %v1537
          %v1550 = vpack.c.b16 %v1540, %v1539
          %v1551 = vpack.c.b16 %v1542, %v1541
          %v1552 = vpack.c.b16 %v1544, %v1543
          %1561 = vmatprep.subr.bf16.mxu0 0
          %1562 = vmatpush1.bf16.msra.mxu0 %v1545
          %1563 = vmatprep.subr.bf16.mxu0 0
          %1564 = vmatpush1.bf16.msra.mxu0 %v1546
          %1565 = vmatprep.subr.bf16.mxu0 0
          %1566 = vmatpush1.bf16.msra.mxu0 %v1547
          %1567 = vmatprep.subr.bf16.mxu0 0
          %1568 = vmatpush1.bf16.msra.mxu0 %v1548
          %1569 = vmatprep.subr.bf16.mxu0 0
          %1570 = vmatpush1.bf16.msra.mxu0 %v1549
          %1571 = vmatprep.subr.bf16.mxu0 0
          %1572 = vmatpush1.bf16.msra.mxu0 %v1550
          %1573 = vmatprep.subr.bf16.mxu0 0
          %1574 = vmatpush1.bf16.msra.mxu0 %v1551
          %1575 = vmatprep.subr.bf16.mxu0 0
          %1576 = vmatpush1.bf16.msra.mxu0 %v1552
          %1577 = vmatprep.subr.bf16.mxu0 0
          %1578 = vmatpush1.bf16.msra.mxu0 0
          %1579 = vmatprep.subr.bf16.mxu0 0
          %1580 = vmatpush1.bf16.msra.mxu0 0
          %1581 = vmatprep.subr.bf16.mxu0 0
          %1582 = vmatpush1.bf16.msra.mxu0 0
          %1583 = vmatprep.subr.bf16.mxu0 0
          %1584 = vmatpush1.bf16.msra.mxu0 0
          %1585 = vmatprep.subr.bf16.mxu0 0
          %1586 = vmatpush1.bf16.msra.mxu0 0
          %1587 = vmatprep.subr.bf16.mxu0 0
          %1588 = vmatpush1.bf16.msra.mxu0 0
          %1589 = vmatprep.subr.bf16.mxu0 0
          %1590 = vmatpush1.bf16.msra.mxu0 0
          %1591 = vmatprep.subr.bf16.mxu0 0
          %1592 = vmatpush1.bf16.msra.mxu0 0
          %1593 = vmatprep.mubr.bf16.mxu0 0
          %1594 = vmatmul.mubr.bf16.gmra.mrb[0].mxu0 %v1352
          %v1595 = vpop.f32.mrb[0].mxu0
          %v1596 = vadd.f32 %v1451, %v1595
          %v1597 = vpop.f32.mrb[0].mxu0
          %v1598 = vpop.f32.mrb[0].mxu0
          %v1599 = vadd.f32 %v1454, %v1598
          %v1600 = vpop.f32.mrb[0].mxu0
          %1601 = vmatprep.mubr.bf16.mxu0 0
          %1602 = vmatmul.mubr.bf16.gmra.mrb[0].mxu0 %v1353
          %v1603 = vpop.f32.mrb[0].mxu0
          %v1604 = vadd.f32 %v1459, %v1603
          %v1605 = vpop.f32.mrb[0].mxu0
          %v1606 = vpop.f32.mrb[0].mxu0
          %v1607 = vadd.f32 %v1462, %v1606
          %v1608 = vpop.f32.mrb[0].mxu0
          %1609 = vmatprep.mubr.bf16.mxu0 0
          %1610 = vmatmul.mubr.bf16.gmra.mrb[0].mxu0 %v1354
          %v1611 = vpop.f32.mrb[0].mxu0
          %v1612 = vadd.f32 %v1467, %v1611
          %v1613 = vpop.f32.mrb[0].mxu0
          %v1614 = vpop.f32.mrb[0].mxu0
          %v1615 = vadd.f32 %v1470, %v1614
          %v1616 = vpop.f32.mrb[0].mxu0
          %1617 = vmatprep.mubr.bf16.mxu0 0
          %1618 = vmatmul.mubr.bf16.gmra.mrb[0].mxu0 %v1355
          %v1619 = vpop.f32.mrb[0].mxu0
          %v1620 = vadd.f32 %v1475, %v1619
          %v1621 = vpop.f32.mrb[0].mxu0
          %v1622 = vpop.f32.mrb[0].mxu0
          %v1623 = vadd.f32 %v1478, %v1622
          %v1624 = vpop.f32.mrb[0].mxu0
          %1625 = vmatprep.mubr.bf16.mxu0 0
          %1626 = vmatmul.mubr.bf16.gmra.mrb[0].mxu0 %v1356
          %v1627 = vpop.f32.mrb[0].mxu0
          %v1628 = vadd.f32 %v1483, %v1627
          %v1629 = vpop.f32.mrb[0].mxu0
          %v1630 = vpop.f32.mrb[0].mxu0
          %v1631 = vadd.f32 %v1486, %v1630
          %v1632 = vpop.f32.mrb[0].mxu0
          %1633 = vmatprep.mubr.bf16.mxu0 0
          %1634 = vmatmul.mubr.bf16.gmra.mrb[0].mxu0 %v1357
          %v1635 = vpop.f32.mrb[0].mxu0
          %v1636 = vadd.f32 %v1491, %v1635
          %v1637 = vpop.f32.mrb[0].mxu0
          %v1638 = vpop.f32.mrb[0].mxu0
          %v1639 = vadd.f32 %v1494, %v1638
          %v1640 = vpop.f32.mrb[0].mxu0
          %1641 = vmatprep.mubr.bf16.mxu0 0
          %1642 = vmatmul.mubr.bf16.gmra.mrb[0].mxu0 %v1358
          %v1643 = vpop.f32.mrb[0].mxu0
          %v1644 = vadd.f32 %v1499, %v1643
          %v1645 = vpop.f32.mrb[0].mxu0
          %v1646 = vpop.f32.mrb[0].mxu0
          %v1647 = vadd.f32 %v1502, %v1646
          %v1648 = vpop.f32.mrb[0].mxu0
          %1649 = vmatprep.mubr.bf16.mxu0 0
          %1650 = vmatmul.mubr.bf16.gmra.mrb[0].mxu0 %v1359
          %v1651 = vpop.f32.mrb[0].mxu0
          %v1652 = vadd.f32 %v1507, %v1651
          %v1653 = vpop.f32.mrb[0].mxu0
          %v1654 = vpop.f32.mrb[0].mxu0
          %v1655 = vadd.f32 %v1510, %v1654
          %v1656 = vpop.f32.mrb[0].mxu0
          %1657 = vdwg.mxu0
          %v1659 = vlaneseq
          %v1660 = vshrl.u32 %v1659, 7
          %v1661 = vsub.s32 0, %v1660
          %v1662 = vrot.slane %v506, %v1661
          %v1664 = vadd.f32 %v1596, %v1662
          %v1665 = vadd.f32 %v1599, %v1662
          %v1666 = vadd.f32 %v1604, %v1662
          %v1667 = vadd.f32 %v1607, %v1662
          %v1668 = vadd.f32 %v1612, %v1662
          %v1669 = vadd.f32 %v1615, %v1662
          %v1670 = vadd.f32 %v1620, %v1662
          %v1671 = vadd.f32 %v1623, %v1662
          %v1672 = vadd.f32 %v1628, %v1662
          %v1673 = vadd.f32 %v1631, %v1662
          %v1674 = vadd.f32 %v1636, %v1662
          %v1675 = vadd.f32 %v1639, %v1662
          %v1676 = vadd.f32 %v1644, %v1662
          %v1677 = vadd.f32 %v1647, %v1662
          %v1678 = vadd.f32 %v1652, %v1662
          %v1679 = vadd.f32 %v1655, %v1662
          %vm1680 = vcmp.ge.f32.partialorder %v1664, 0.0
          %vm1681 = vcmp.ge.f32.partialorder %v1665, 0.0
          %vm1682 = vcmp.ge.f32.partialorder %v1666, 0.0
          %vm1683 = vcmp.ge.f32.partialorder %v1667, 0.0
          %vm1684 = vcmp.ge.f32.partialorder %v1668, 0.0
          %vm1685 = vcmp.ge.f32.partialorder %v1669, 0.0
          %vm1686 = vcmp.ge.f32.partialorder %v1670, 0.0
          %vm1687 = vcmp.ge.f32.partialorder %v1671, 0.0
          %vm1688 = vcmp.ge.f32.partialorder %v1672, 0.0
          %vm1689 = vcmp.ge.f32.partialorder %v1673, 0.0
          %vm1690 = vcmp.ge.f32.partialorder %v1674, 0.0
          %vm1691 = vcmp.ge.f32.partialorder %v1675, 0.0
          %vm1692 = vcmp.ge.f32.partialorder %v1676, 0.0
          %vm1693 = vcmp.ge.f32.partialorder %v1677, 0.0
          %vm1694 = vcmp.ge.f32.partialorder %v1678, 0.0
          %vm1695 = vcmp.ge.f32.partialorder %v1679, 0.0
          %v1696 = vstv %s508
          %v1697 = vmul.f32 %v1696, %v1664
          %v1698 = vmul.f32 %v1696, %v1665
          %v1699 = vmul.f32 %v1696, %v1666
          %v1700 = vmul.f32 %v1696, %v1667
          %v1701 = vmul.f32 %v1696, %v1668
          %v1702 = vmul.f32 %v1696, %v1669
          %v1703 = vmul.f32 %v1696, %v1670
          %v1704 = vmul.f32 %v1696, %v1671
          %v1705 = vmul.f32 %v1696, %v1672
          %v1706 = vmul.f32 %v1696, %v1673
          %v1707 = vmul.f32 %v1696, %v1674
          %v1708 = vmul.f32 %v1696, %v1675
          %v1709 = vmul.f32 %v1696, %v1676
          %v1710 = vmul.f32 %v1696, %v1677
          %v1711 = vmul.f32 %v1696, %v1678
          %v1712 = vmul.f32 %v1696, %v1679
          %v1713 = vsel %vm1680, %v1664, %v1697
          %v1714 = vsel %vm1681, %v1665, %v1698
          %v1715 = vsel %vm1682, %v1666, %v1699
          %v1716 = vsel %vm1683, %v1667, %v1700
          %v1717 = vsel %vm1684, %v1668, %v1701
          %v1718 = vsel %vm1685, %v1669, %v1702
          %v1719 = vsel %vm1686, %v1670, %v1703
          %v1720 = vsel %vm1687, %v1671, %v1704
          %v1721 = vsel %vm1688, %v1672, %v1705
          %v1722 = vsel %vm1689, %v1673, %v1706
          %v1723 = vsel %vm1690, %v1674, %v1707
          %v1724 = vsel %vm1691, %v1675, %v1708
          %v1725 = vsel %vm1692, %v1676, %v1709
          %v1726 = vsel %vm1693, %v1677, %v1710
          %v1727 = vsel %vm1694, %v1678, %v1711
          %v1728 = vsel %vm1695, %v1679, %v1712
          %v1729 = vpack.c.bf16 %v1714, %v1713
          %v1730 = vpack.c.bf16 %v1716, %v1715
          %v1731 = vpack.c.bf16 %v1718, %v1717
          %v1732 = vpack.c.bf16 %v1720, %v1719
          %v1733 = vpack.c.bf16 %v1722, %v1721
          %v1734 = vpack.c.bf16 %v1724, %v1723
          %v1735 = vpack.c.bf16 %v1726, %v1725
          %v1736 = vpack.c.bf16 %v1728, %v1727
          %s1737 = smul.addr %s1348, 8
          %s1738 = scalar_lea.vmem [#allocation2], %s1737
          %1739 = vst [vmem:[%s1738] sm:$0xff] %v1729
          %1740 = vst [vmem:[%s1738 + $0x8] sm:$0xff] %v1730
          %1741 = vst [vmem:[%s1738 + $0x10] sm:$0xff] %v1731
          %1742 = vst [vmem:[%s1738 + $0x18] sm:$0xff] %v1732
          %1743 = vst [vmem:[%s1738 + $0x20] sm:$0xff] %v1733
          %1744 = vst [vmem:[%s1738 + $0x28] sm:$0xff] %v1734
          %1745 = vst [vmem:[%s1738 + $0x30] sm:$0xff] %v1735
          %1746 = vst [vmem:[%s1738 + $0x38] sm:$0xff] %v1736
        $region76: #{run_forward.1} parent=51 // pred_fallthru
          _
        %p1747 = scmp.eq.s32.totalorder %s1189, 0
        %p1748 = pnand %p1177, %p1747
        %p1749 = pneg %p1748
        // Predicated region
        $region77: #{run_forward.1} parent=51 // pred_check
          _
        $region78: #{run_forward.1} parent=51 // pred_check_branch
          %1751 = sbr.rel (%p1748) target = $region80
        $region79: #{run_forward.1} parent=51 // pred_region
          %v1752 = vld [vmem:[#allocation2] sm:$0xff]
          %v1753 = vld [vmem:[#allocation2 + $0x8] sm:$0xff]
          %v1754 = vld [vmem:[#allocation2 + $0x10] sm:$0xff]
          %v1755 = vld [vmem:[#allocation2 + $0x18] sm:$0xff]
          %v1756 = vld [vmem:[#allocation2 + $0x20] sm:$0xff]
          %v1757 = vld [vmem:[#allocation2 + $0x28] sm:$0xff]
          %v1758 = vld [vmem:[#allocation2 + $0x30] sm:$0xff]
          %v1759 = vld [vmem:[#allocation2 + $0x38] sm:$0xff]
          %v1776 = vunpack.c.l.b16 %v457
          %v1777 = vunpack.c.l.b16 %v458
          %v1778 = vunpack.c.l.b16 %v459
          %v1779 = vunpack.c.l.b16 %v460
          %v1780 = vunpack.c.l.b16 %v461
          %v1781 = vunpack.c.l.b16 %v462
          %v1782 = vunpack.c.l.b16 %v463
          %v1783 = vunpack.c.l.b16 %v464
          %v1784 = vunpack.c.l.b16 %v465
          %v1785 = vunpack.c.l.b16 %v466
          %v1786 = vunpack.c.l.b16 %v467
          %v1787 = vunpack.c.l.b16 %v468
          %v1788 = vunpack.c.l.b16 %v469
          %v1789 = vunpack.c.l.b16 %v470
          %v1790 = vunpack.c.l.b16 %v471
          %v1791 = vunpack.c.l.b16 %v472
          %v1792 = vpack.c.b16 %v1777, %v1776
          %v1793 = vpack.c.b16 %v1779, %v1778
          %v1794 = vpack.c.b16 %v1781, %v1780
          %v1795 = vpack.c.b16 %v1783, %v1782
          %v1796 = vpack.c.b16 %v1785, %v1784
          %v1797 = vpack.c.b16 %v1787, %v1786
          %v1798 = vpack.c.b16 %v1789, %v1788
          %v1799 = vpack.c.b16 %v1791, %v1790
          %1808 = vmatprep.subr.bf16.mxu0 0
          %1809 = vmatpush1.bf16.msra.mxu0 %v1752
          %1810 = vmatprep.subr.bf16.mxu0 0
          %1811 = vmatpush1.bf16.msra.mxu0 %v1753
          %1812 = vmatprep.subr.bf16.mxu0 0
          %1813 = vmatpush1.bf16.msra.mxu0 %v1754
          %1814 = vmatprep.subr.bf16.mxu0 0
          %1815 = vmatpush1.bf16.msra.mxu0 %v1755
          %1816 = vmatprep.subr.bf16.mxu0 0
          %1817 = vmatpush1.bf16.msra.mxu0 %v1756
          %1818 = vmatprep.subr.bf16.mxu0 0
          %1819 = vmatpush1.bf16.msra.mxu0 %v1757
          %1820 = vmatprep.subr.bf16.mxu0 0
          %1821 = vmatpush1.bf16.msra.mxu0 %v1758
          %1822 = vmatprep.subr.bf16.mxu0 0
          %1823 = vmatpush1.bf16.msra.mxu0 %v1759
          %1824 = vmatprep.subr.bf16.mxu0 0
          %1825 = vmatpush1.bf16.msra.mxu0 0
          %1826 = vmatprep.subr.bf16.mxu0 0
          %1827 = vmatpush1.bf16.msra.mxu0 0
          %1828 = vmatprep.subr.bf16.mxu0 0
          %1829 = vmatpush1.bf16.msra.mxu0 0
          %1830 = vmatprep.subr.bf16.mxu0 0
          %1831 = vmatpush1.bf16.msra.mxu0 0
          %1832 = vmatprep.subr.bf16.mxu0 0
          %1833 = vmatpush1.bf16.msra.mxu0 0
          %1834 = vmatprep.subr.bf16.mxu0 0
          %1835 = vmatpush1.bf16.msra.mxu0 0
          %1836 = vmatprep.subr.bf16.mxu0 0
          %1837 = vmatpush1.bf16.msra.mxu0 0
          %1838 = vmatprep.subr.bf16.mxu0 0
          %1839 = vmatpush1.bf16.msra.mxu0 0
          %1840 = vmatprep.mubr.bf16.mxu0 0
          %1841 = vmatmul.mubr.bf16.gmra.mrb[0].mxu0 %v1792
          %v1842 = vpop.f32.mrb[0].mxu0
          %v1843 = vadd.f32 0.0, %v1842
          %v1844 = vpop.f32.mrb[0].mxu0
          %v1845 = vpop.f32.mrb[0].mxu0
          %v1846 = vadd.f32 0.0, %v1845
          %v1847 = vpop.f32.mrb[0].mxu0
          %1848 = vmatprep.mubr.bf16.mxu0 0
          %1849 = vmatmul.mubr.bf16.gmra.mrb[0].mxu0 %v1793
          %v1850 = vpop.f32.mrb[0].mxu0
          %v1851 = vadd.f32 0.0, %v1850
          %v1852 = vpop.f32.mrb[0].mxu0
          %v1853 = vpop.f32.mrb[0].mxu0
          %v1854 = vadd.f32 0.0, %v1853
          %v1855 = vpop.f32.mrb[0].mxu0
          %1856 = vmatprep.mubr.bf16.mxu0 0
          %1857 = vmatmul.mubr.bf16.gmra.mrb[0].mxu0 %v1794
          %v1858 = vpop.f32.mrb[0].mxu0
          %v1859 = vadd.f32 0.0, %v1858
          %v1860 = vpop.f32.mrb[0].mxu0
          %v1861 = vpop.f32.mrb[0].mxu0
          %v1862 = vadd.f32 0.0, %v1861
          %v1863 = vpop.f32.mrb[0].mxu0
          %1864 = vmatprep.mubr.bf16.mxu0 0
          %1865 = vmatmul.mubr.bf16.gmra.mrb[0].mxu0 %v1795
          %v1866 = vpop.f32.mrb[0].mxu0
          %v1867 = vadd.f32 0.0, %v1866
          %v1868 = vpop.f32.mrb[0].mxu0
          %v1869 = vpop.f32.mrb[0].mxu0
          %v1870 = vadd.f32 0.0, %v1869
          %v1871 = vpop.f32.mrb[0].mxu0
          %1872 = vmatprep.mubr.bf16.mxu0 0
          %1873 = vmatmul.mubr.bf16.gmra.mrb[0].mxu0 %v1796
          %v1874 = vpop.f32.mrb[0].mxu0
          %v1875 = vadd.f32 0.0, %v1874
          %v1876 = vpop.f32.mrb[0].mxu0
          %v1877 = vpop.f32.mrb[0].mxu0
          %v1878 = vadd.f32 0.0, %v1877
          %v1879 = vpop.f32.mrb[0].mxu0
          %1880 = vmatprep.mubr.bf16.mxu0 0
          %1881 = vmatmul.mubr.bf16.gmra.mrb[0].mxu0 %v1797
          %v1882 = vpop.f32.mrb[0].mxu0
          %v1883 = vadd.f32 0.0, %v1882
          %v1884 = vpop.f32.mrb[0].mxu0
          %v1885 = vpop.f32.mrb[0].mxu0
          %v1886 = vadd.f32 0.0, %v1885
          %v1887 = vpop.f32.mrb[0].mxu0
          %1888 = vmatprep.mubr.bf16.mxu0 0
          %1889 = vmatmul.mubr.bf16.gmra.mrb[0].mxu0 %v1798
          %v1890 = vpop.f32.mrb[0].mxu0
          %v1891 = vadd.f32 0.0, %v1890
          %v1892 = vpop.f32.mrb[0].mxu0
          %v1893 = vpop.f32.mrb[0].mxu0
          %v1894 = vadd.f32 0.0, %v1893
          %v1895 = vpop.f32.mrb[0].mxu0
          %1896 = vmatprep.mubr.bf16.mxu0 0
          %1897 = vmatmul.mubr.bf16.gmra.mrb[0].mxu0 %v1799
          %v1898 = vpop.f32.mrb[0].mxu0
          %v1899 = vadd.f32 0.0, %v1898
          %v1900 = vpop.f32.mrb[0].mxu0
          %v1901 = vpop.f32.mrb[0].mxu0
          %v1902 = vadd.f32 0.0, %v1901
          %v1903 = vpop.f32.mrb[0].mxu0
          %1904 = vdwg.mxu0
          %s1905 = sshra.s32 %s452, 4
          %s1906 = sand.u32 %s452, 15
          %s1907 = smul.addr %s1905, 8
          %s1908 = scalar_lea.vmem [#allocation2], %s1907
          %v1909 = vld [vmem:[%s1908] sm:$0xff]
          %v1910 = vld [vmem:[%s1908 + $0x8] sm:$0xff]
          %v1911 = vld [vmem:[%s1908 + $0x10] sm:$0xff]
          %v1912 = vld [vmem:[%s1908 + $0x18] sm:$0xff]
          %v1913 = vld [vmem:[%s1908 + $0x20] sm:$0xff]
          %v1914 = vld [vmem:[%s1908 + $0x28] sm:$0xff]
          %v1915 = vld [vmem:[%s1908 + $0x30] sm:$0xff]
          %v1916 = vld [vmem:[%s1908 + $0x38] sm:$0xff]
          %v1917 = vpack.c.bf16 %v1846, %v1843
          %v1918 = vpack.c.bf16 %v1854, %v1851
          %v1919 = vpack.c.bf16 %v1862, %v1859
          %v1920 = vpack.c.bf16 %v1870, %v1867
          %v1921 = vpack.c.bf16 %v1878, %v1875
          %v1922 = vpack.c.bf16 %v1886, %v1883
          %v1923 = vpack.c.bf16 %v1894, %v1891
          %v1924 = vpack.c.bf16 %v1902, %v1899
          %v1941 = vunpack.c.l.b16 %v490
          %v1942 = vunpack.c.l.b16 %v491
          %v1943 = vunpack.c.l.b16 %v492
          %v1944 = vunpack.c.l.b16 %v493
          %v1945 = vunpack.c.l.b16 %v494
          %v1946 = vunpack.c.l.b16 %v495
          %v1947 = vunpack.c.l.b16 %v496
          %v1948 = vunpack.c.l.b16 %v497
          %v1949 = vunpack.c.l.b16 %v498
          %v1950 = vunpack.c.l.b16 %v499
          %v1951 = vunpack.c.l.b16 %v500
          %v1952 = vunpack.c.l.b16 %v501
          %v1953 = vunpack.c.l.b16 %v502
          %v1954 = vunpack.c.l.b16 %v503
          %v1955 = vunpack.c.l.b16 %v504
          %v1956 = vunpack.c.l.b16 %v505
          %v1957 = vpack.c.b16 %v1942, %v1941
          %v1958 = vpack.c.b16 %v1944, %v1943
          %v1959 = vpack.c.b16 %v1946, %v1945
          %v1960 = vpack.c.b16 %v1948, %v1947
          %v1961 = vpack.c.b16 %v1950, %v1949
          %v1962 = vpack.c.b16 %v1952, %v1951
          %v1963 = vpack.c.b16 %v1954, %v1953
          %v1964 = vpack.c.b16 %v1956, %v1955
          %1973 = vmatprep.subr.bf16.mxu0 0
          %1974 = vmatpush1.bf16.msra.mxu0 %v1957
          %1975 = vmatprep.subr.bf16.mxu0 0
          %1976 = vmatpush1.bf16.msra.mxu0 %v1958
          %1977 = vmatprep.subr.bf16.mxu0 0
          %1978 = vmatpush1.bf16.msra.mxu0 %v1959
          %1979 = vmatprep.subr.bf16.mxu0 0
          %1980 = vmatpush1.bf16.msra.mxu0 %v1960
          %1981 = vmatprep.subr.bf16.mxu0 0
          %1982 = vmatpush1.bf16.msra.mxu0 %v1961
          %1983 = vmatprep.subr.bf16.mxu0 0
          %1984 = vmatpush1.bf16.msra.mxu0 %v1962
          %1985 = vmatprep.subr.bf16.mxu0 0
          %1986 = vmatpush1.bf16.msra.mxu0 %v1963
          %1987 = vmatprep.subr.bf16.mxu0 0
          %1988 = vmatpush1.bf16.msra.mxu0 %v1964
          %1989 = vmatprep.subr.bf16.mxu0 0
          %1990 = vmatpush1.bf16.msra.mxu0 0
          %1991 = vmatprep.subr.bf16.mxu0 0
          %1992 = vmatpush1.bf16.msra.mxu0 0
          %1993 = vmatprep.subr.bf16.mxu0 0
          %1994 = vmatpush1.bf16.msra.mxu0 0
          %1995 = vmatprep.subr.bf16.mxu0 0
          %1996 = vmatpush1.bf16.msra.mxu0 0
          %1997 = vmatprep.subr.bf16.mxu0 0
          %1998 = vmatpush1.bf16.msra.mxu0 0
          %1999 = vmatprep.subr.bf16.mxu0 0
          %2000 = vmatpush1.bf16.msra.mxu0 0
          %2001 = vmatprep.subr.bf16.mxu0 0
          %2002 = vmatpush1.bf16.msra.mxu0 0
          %2003 = vmatprep.subr.bf16.mxu0 0
          %2004 = vmatpush1.bf16.msra.mxu0 0
          %2005 = vmatprep.mubr.bf16.mxu0 0
          %2006 = vmatmul.mubr.bf16.gmra.mrb[0].mxu0 %v1917
          %v2007 = vpop.f32.mrb[0].mxu0
          %v2008 = vadd.f32 0.0, %v2007
          %v2009 = vpop.f32.mrb[0].mxu0
          %v2010 = vpop.f32.mrb[0].mxu0
          %v2011 = vadd.f32 0.0, %v2010
          %v2012 = vpop.f32.mrb[0].mxu0
          %2013 = vmatprep.mubr.bf16.mxu0 0
          %2014 = vmatmul.mubr.bf16.gmra.mrb[0].mxu0 %v1918
          %v2015 = vpop.f32.mrb[0].mxu0
          %v2016 = vadd.f32 0.0, %v2015
          %v2017 = vpop.f32.mrb[0].mxu0
          %v2018 = vpop.f32.mrb[0].mxu0
          %v2019 = vadd.f32 0.0, %v2018
          %v2020 = vpop.f32.mrb[0].mxu0
          %2021 = vmatprep.mubr.bf16.mxu0 0
          %2022 = vmatmul.mubr.bf16.gmra.mrb[0].mxu0 %v1919
          %v2023 = vpop.f32.mrb[0].mxu0
          %v2024 = vadd.f32 0.0, %v2023
          %v2025 = vpop.f32.mrb[0].mxu0
          %v2026 = vpop.f32.mrb[0].mxu0
          %v2027 = vadd.f32 0.0, %v2026
          %v2028 = vpop.f32.mrb[0].mxu0
          %2029 = vmatprep.mubr.bf16.mxu0 0
          %2030 = vmatmul.mubr.bf16.gmra.mrb[0].mxu0 %v1920
          %v2031 = vpop.f32.mrb[0].mxu0
          %v2032 = vadd.f32 0.0, %v2031
          %v2033 = vpop.f32.mrb[0].mxu0
          %v2034 = vpop.f32.mrb[0].mxu0
          %v2035 = vadd.f32 0.0, %v2034
          %v2036 = vpop.f32.mrb[0].mxu0
          %2037 = vmatprep.mubr.bf16.mxu0 0
          %2038 = vmatmul.mubr.bf16.gmra.mrb[0].mxu0 %v1921
          %v2039 = vpop.f32.mrb[0].mxu0
          %v2040 = vadd.f32 0.0, %v2039
          %v2041 = vpop.f32.mrb[0].mxu0
          %v2042 = vpop.f32.mrb[0].mxu0
          %v2043 = vadd.f32 0.0, %v2042
          %v2044 = vpop.f32.mrb[0].mxu0
          %2045 = vmatprep.mubr.bf16.mxu0 0
          %2046 = vmatmul.mubr.bf16.gmra.mrb[0].mxu0 %v1922
          %v2047 = vpop.f32.mrb[0].mxu0
          %v2048 = vadd.f32 0.0, %v2047
          %v2049 = vpop.f32.mrb[0].mxu0
          %v2050 = vpop.f32.mrb[0].mxu0
          %v2051 = vadd.f32 0.0, %v2050
          %v2052 = vpop.f32.mrb[0].mxu0
          %2053 = vmatprep.mubr.bf16.mxu0 0
          %2054 = vmatmul.mubr.bf16.gmra.mrb[0].mxu0 %v1923
          %v2055 = vpop.f32.mrb[0].mxu0
          %v2056 = vadd.f32 0.0, %v2055
          %v2057 = vpop.f32.mrb[0].mxu0
          %v2058 = vpop.f32.mrb[0].mxu0
          %v2059 = vadd.f32 0.0, %v2058
          %v2060 = vpop.f32.mrb[0].mxu0
          %2061 = vmatprep.mubr.bf16.mxu0 0
          %2062 = vmatmul.mubr.bf16.gmra.mrb[0].mxu0 %v1924
          %v2063 = vpop.f32.mrb[0].mxu0
          %v2064 = vadd.f32 0.0, %v2063
          %v2065 = vpop.f32.mrb[0].mxu0
          %v2066 = vpop.f32.mrb[0].mxu0
          %v2067 = vadd.f32 0.0, %v2066
          %v2068 = vpop.f32.mrb[0].mxu0
          %2069 = vdwg.mxu0
          %v2086 = vunpack.c.l.b16 %v473
          %v2087 = vunpack.c.l.b16 %v474
          %v2088 = vunpack.c.l.b16 %v475
          %v2089 = vunpack.c.l.b16 %v476
          %v2090 = vunpack.c.l.b16 %v477
          %v2091 = vunpack.c.l.b16 %v478
          %v2092 = vunpack.c.l.b16 %v479
          %v2093 = vunpack.c.l.b16 %v480
          %v2094 = vunpack.c.l.b16 %v481
          %v2095 = vunpack.c.l.b16 %v482
          %v2096 = vunpack.c.l.b16 %v483
          %v2097 = vunpack.c.l.b16 %v484
          %v2098 = vunpack.c.l.b16 %v485
          %v2099 = vunpack.c.l.b16 %v486
          %v2100 = vunpack.c.l.b16 %v487
          %v2101 = vunpack.c.l.b16 %v488
          %v2102 = vpack.c.b16 %v2087, %v2086
          %v2103 = vpack.c.b16 %v2089, %v2088
          %v2104 = vpack.c.b16 %v2091, %v2090
          %v2105 = vpack.c.b16 %v2093, %v2092
          %v2106 = vpack.c.b16 %v2095, %v2094
          %v2107 = vpack.c.b16 %v2097, %v2096
          %v2108 = vpack.c.b16 %v2099, %v2098
          %v2109 = vpack.c.b16 %v2101, %v2100
          %2118 = vmatprep.subr.bf16.mxu0 0
          %2119 = vmatpush1.bf16.msra.mxu0 %v2102
          %2120 = vmatprep.subr.bf16.mxu0 0
          %2121 = vmatpush1.bf16.msra.mxu0 %v2103
          %2122 = vmatprep.subr.bf16.mxu0 0
          %2123 = vmatpush1.bf16.msra.mxu0 %v2104
          %2124 = vmatprep.subr.bf16.mxu0 0
          %2125 = vmatpush1.bf16.msra.mxu0 %v2105
          %2126 = vmatprep.subr.bf16.mxu0 0
          %2127 = vmatpush1.bf16.msra.mxu0 %v2106
          %2128 = vmatprep.subr.bf16.mxu0 0
          %2129 = vmatpush1.bf16.msra.mxu0 %v2107
          %2130 = vmatprep.subr.bf16.mxu0 0
          %2131 = vmatpush1.bf16.msra.mxu0 %v2108
          %2132 = vmatprep.subr.bf16.mxu0 0
          %2133 = vmatpush1.bf16.msra.mxu0 %v2109
          %2134 = vmatprep.subr.bf16.mxu0 0
          %2135 = vmatpush1.bf16.msra.mxu0 0
          %2136 = vmatprep.subr.bf16.mxu0 0
          %2137 = vmatpush1.bf16.msra.mxu0 0
          %2138 = vmatprep.subr.bf16.mxu0 0
          %2139 = vmatpush1.bf16.msra.mxu0 0
          %2140 = vmatprep.subr.bf16.mxu0 0
          %2141 = vmatpush1.bf16.msra.mxu0 0
          %2142 = vmatprep.subr.bf16.mxu0 0
          %2143 = vmatpush1.bf16.msra.mxu0 0
          %2144 = vmatprep.subr.bf16.mxu0 0
          %2145 = vmatpush1.bf16.msra.mxu0 0
          %2146 = vmatprep.subr.bf16.mxu0 0
          %2147 = vmatpush1.bf16.msra.mxu0 0
          %2148 = vmatprep.subr.bf16.mxu0 0
          %2149 = vmatpush1.bf16.msra.mxu0 0
          %2150 = vmatprep.mubr.bf16.mxu0 0
          %2151 = vmatmul.mubr.bf16.gmra.mrb[0].mxu0 %v1909
          %v2152 = vpop.f32.mrb[0].mxu0
          %v2153 = vadd.f32 %v2008, %v2152
          %v2154 = vpop.f32.mrb[0].mxu0
          %v2155 = vpop.f32.mrb[0].mxu0
          %v2156 = vadd.f32 %v2011, %v2155
          %v2157 = vpop.f32.mrb[0].mxu0
          %2158 = vmatprep.mubr.bf16.mxu0 0
          %2159 = vmatmul.mubr.bf16.gmra.mrb[0].mxu0 %v1910
          %v2160 = vpop.f32.mrb[0].mxu0
          %v2161 = vadd.f32 %v2016, %v2160
          %v2162 = vpop.f32.mrb[0].mxu0
          %v2163 = vpop.f32.mrb[0].mxu0
          %v2164 = vadd.f32 %v2019, %v2163
          %v2165 = vpop.f32.mrb[0].mxu0
          %2166 = vmatprep.mubr.bf16.mxu0 0
          %2167 = vmatmul.mubr.bf16.gmra.mrb[0].mxu0 %v1911
          %v2168 = vpop.f32.mrb[0].mxu0
          %v2169 = vadd.f32 %v2024, %v2168
          %v2170 = vpop.f32.mrb[0].mxu0
          %v2171 = vpop.f32.mrb[0].mxu0
          %v2172 = vadd.f32 %v2027, %v2171
          %v2173 = vpop.f32.mrb[0].mxu0
          %2174 = vmatprep.mubr.bf16.mxu0 0
          %2175 = vmatmul.mubr.bf16.gmra.mrb[0].mxu0 %v1912
          %v2176 = vpop.f32.mrb[0].mxu0
          %v2177 = vadd.f32 %v2032, %v2176
          %v2178 = vpop.f32.mrb[0].mxu0
          %v2179 = vpop.f32.mrb[0].mxu0
          %v2180 = vadd.f32 %v2035, %v2179
          %v2181 = vpop.f32.mrb[0].mxu0
          %2182 = vmatprep.mubr.bf16.mxu0 0
          %2183 = vmatmul.mubr.bf16.gmra.mrb[0].mxu0 %v1913
          %v2184 = vpop.f32.mrb[0].mxu0
          %v2185 = vadd.f32 %v2040, %v2184
          %v2186 = vpop.f32.mrb[0].mxu0
          %v2187 = vpop.f32.mrb[0].mxu0
          %v2188 = vadd.f32 %v2043, %v2187
          %v2189 = vpop.f32.mrb[0].mxu0
          %2190 = vmatprep.mubr.bf16.mxu0 0
          %2191 = vmatmul.mubr.bf16.gmra.mrb[0].mxu0 %v1914
          %v2192 = vpop.f32.mrb[0].mxu0
          %v2193 = vadd.f32 %v2048, %v2192
          %v2194 = vpop.f32.mrb[0].mxu0
          %v2195 = vpop.f32.mrb[0].mxu0
          %v2196 = vadd.f32 %v2051, %v2195
          %v2197 = vpop.f32.mrb[0].mxu0
          %2198 = vmatprep.mubr.bf16.mxu0 0
          %2199 = vmatmul.mubr.bf16.gmra.mrb[0].mxu0 %v1915
          %v2200 = vpop.f32.mrb[0].mxu0
          %v2201 = vadd.f32 %v2056, %v2200
          %v2202 = vpop.f32.mrb[0].mxu0
          %v2203 = vpop.f32.mrb[0].mxu0
          %v2204 = vadd.f32 %v2059, %v2203
          %v2205 = vpop.f32.mrb[0].mxu0
          %2206 = vmatprep.mubr.bf16.mxu0 0
          %2207 = vmatmul.mubr.bf16.gmra.mrb[0].mxu0 %v1916
          %v2208 = vpop.f32.mrb[0].mxu0
          %v2209 = vadd.f32 %v2064, %v2208
          %v2210 = vpop.f32.mrb[0].mxu0
          %v2211 = vpop.f32.mrb[0].mxu0
          %v2212 = vadd.f32 %v2067, %v2211
          %v2213 = vpop.f32.mrb[0].mxu0
          %2214 = vdwg.mxu0
          %v2216 = vlaneseq
          %v2217 = vshrl.u32 %v2216, 7
          %v2218 = vsub.s32 0, %v2217
          %v2219 = vrot.slane %v506, %v2218
          %v2221 = vadd.f32 %v2153, %v2219
          %v2222 = vadd.f32 %v2156, %v2219
          %v2223 = vadd.f32 %v2161, %v2219
          %v2224 = vadd.f32 %v2164, %v2219
          %v2225 = vadd.f32 %v2169, %v2219
          %v2226 = vadd.f32 %v2172, %v2219
          %v2227 = vadd.f32 %v2177, %v2219
          %v2228 = vadd.f32 %v2180, %v2219
          %v2229 = vadd.f32 %v2185, %v2219
          %v2230 = vadd.f32 %v2188, %v2219
          %v2231 = vadd.f32 %v2193, %v2219
          %v2232 = vadd.f32 %v2196, %v2219
          %v2233 = vadd.f32 %v2201, %v2219
          %v2234 = vadd.f32 %v2204, %v2219
          %v2235 = vadd.f32 %v2209, %v2219
          %v2236 = vadd.f32 %v2212, %v2219
          %vm2237 = vcmp.ge.f32.partialorder %v2221, 0.0
          %vm2238 = vcmp.ge.f32.partialorder %v2222, 0.0
          %vm2239 = vcmp.ge.f32.partialorder %v2223, 0.0
          %vm2240 = vcmp.ge.f32.partialorder %v2224, 0.0
          %vm2241 = vcmp.ge.f32.partialorder %v2225, 0.0
          %vm2242 = vcmp.ge.f32.partialorder %v2226, 0.0
          %vm2243 = vcmp.ge.f32.partialorder %v2227, 0.0
          %vm2244 = vcmp.ge.f32.partialorder %v2228, 0.0
          %vm2245 = vcmp.ge.f32.partialorder %v2229, 0.0
          %vm2246 = vcmp.ge.f32.partialorder %v2230, 0.0
          %vm2247 = vcmp.ge.f32.partialorder %v2231, 0.0
          %vm2248 = vcmp.ge.f32.partialorder %v2232, 0.0
          %vm2249 = vcmp.ge.f32.partialorder %v2233, 0.0
          %vm2250 = vcmp.ge.f32.partialorder %v2234, 0.0
          %vm2251 = vcmp.ge.f32.partialorder %v2235, 0.0
          %vm2252 = vcmp.ge.f32.partialorder %v2236, 0.0
          %v2253 = vstv %s508
          %v2254 = vmul.f32 %v2253, %v2221
          %v2255 = vmul.f32 %v2253, %v2222
          %v2256 = vmul.f32 %v2253, %v2223
          %v2257 = vmul.f32 %v2253, %v2224
          %v2258 = vmul.f32 %v2253, %v2225
          %v2259 = vmul.f32 %v2253, %v2226
          %v2260 = vmul.f32 %v2253, %v2227
          %v2261 = vmul.f32 %v2253, %v2228
          %v2262 = vmul.f32 %v2253, %v2229
          %v2263 = vmul.f32 %v2253, %v2230
          %v2264 = vmul.f32 %v2253, %v2231
          %v2265 = vmul.f32 %v2253, %v2232
          %v2266 = vmul.f32 %v2253, %v2233
          %v2267 = vmul.f32 %v2253, %v2234
          %v2268 = vmul.f32 %v2253, %v2235
          %v2269 = vmul.f32 %v2253, %v2236
          %v2270 = vsel %vm2237, %v2221, %v2254
          %v2271 = vsel %vm2238, %v2222, %v2255
          %v2272 = vsel %vm2239, %v2223, %v2256
          %v2273 = vsel %vm2240, %v2224, %v2257
          %v2274 = vsel %vm2241, %v2225, %v2258
          %v2275 = vsel %vm2242, %v2226, %v2259
          %v2276 = vsel %vm2243, %v2227, %v2260
          %v2277 = vsel %vm2244, %v2228, %v2261
          %v2278 = vsel %vm2245, %v2229, %v2262
          %v2279 = vsel %vm2246, %v2230, %v2263
          %v2280 = vsel %vm2247, %v2231, %v2264
          %v2281 = vsel %vm2248, %v2232, %v2265
          %v2282 = vsel %vm2249, %v2233, %v2266
          %v2283 = vsel %vm2250, %v2234, %v2267
          %v2284 = vsel %vm2251, %v2235, %v2268
          %v2285 = vsel %vm2252, %v2236, %v2269
          %v2286 = vpack.c.bf16 %v2271, %v2270
          %v2287 = vpack.c.bf16 %v2273, %v2272
          %v2288 = vpack.c.bf16 %v2275, %v2274
          %v2289 = vpack.c.bf16 %v2277, %v2276
          %v2290 = vpack.c.bf16 %v2279, %v2278
          %v2291 = vpack.c.bf16 %v2281, %v2280
          %v2292 = vpack.c.bf16 %v2283, %v2282
          %v2293 = vpack.c.bf16 %v2285, %v2284
          %s2294 = smul.addr %s1905, 8
          %s2295 = scalar_lea.vmem [#allocation3], %s2294
          %2296 = vst [vmem:[%s2295] sm:$0xff] %v2286
          %2297 = vst [vmem:[%s2295 + $0x8] sm:$0xff] %v2287
          %2298 = vst [vmem:[%s2295 + $0x10] sm:$0xff] %v2288
          %2299 = vst [vmem:[%s2295 + $0x18] sm:$0xff] %v2289
          %2300 = vst [vmem:[%s2295 + $0x20] sm:$0xff] %v2290
          %2301 = vst [vmem:[%s2295 + $0x28] sm:$0xff] %v2291
          %2302 = vst [vmem:[%s2295 + $0x30] sm:$0xff] %v2292
          %2303 = vst [vmem:[%s2295 + $0x38] sm:$0xff] %v2293
        $region80: #{run_forward.1} parent=51 // pred_fallthru
          _
        %p2304 = scmp.eq.s32.totalorder %s34, 3
        %p2305 = scmp.eq.s32.totalorder %s35, 0
        %p2306 = pnand %p2304, %p2305
        %p2307 = pneg %p2306
        // Predicated region
        $region81: #{run_forward.1} parent=51 // pred_check
          _
        $region82: #{run_forward.1} parent=51 // pred_check_branch
          %2309 = sbr.rel (%p2306) target = $region84
        $region83: #{run_forward.1} parent=51 // pred_region
          %v2310 = vld [vmem:[#allocation2] sm:$0x1]
          %v2311 = vld [vmem:[#allocation2] sm:$0x10]
          %v2313 = vshll.u32 %v2311, 16
          %v2315 = vrot.slane %v2313, 4
          %vm2317 = vcmask 1040384
          %vm2318 = vsmask.f32 256
          %vm2319 = vmand %vm2317, %vm2318
          %v2320 = vsel %vm2319, %v2310, %v2315
          %v2321 = vld [vmem:[#allocation10] sm:$0xf]
          %v2322 = vld [vmem:[#allocation10 + $0x4] sm:$0xf]
          %v2323 = vld [vmem:[#allocation10 + $0x8] sm:$0xf]
          %v2324 = vld [vmem:[#allocation10 + $0xc] sm:$0xf]
          %v2325 = vld [vmem:[#allocation10 + $0x10] sm:$0xf]
          %v2326 = vld [vmem:[#allocation10 + $0x14] sm:$0xf]
          %v2327 = vld [vmem:[#allocation10 + $0x18] sm:$0xf]
          %v2328 = vld [vmem:[#allocation10 + $0x1c] sm:$0xf]
          %v2329 = vld [vmem:[#allocation10 + $0x20] sm:$0xf]
          %v2330 = vld [vmem:[#allocation10 + $0x24] sm:$0xf]
          %v2331 = vld [vmem:[#allocation10 + $0x28] sm:$0xf]
          %v2332 = vld [vmem:[#allocation10 + $0x2c] sm:$0xf]
          %v2333 = vld [vmem:[#allocation10 + $0x30] sm:$0xf]
          %v2334 = vld [vmem:[#allocation10 + $0x34] sm:$0xf]
          %v2335 = vld [vmem:[#allocation10 + $0x38] sm:$0xf]
          %v2336 = vld [vmem:[#allocation10 + $0x3c] sm:$0xf]
          %v2337 = vld [vmem:[%s5] sm:$0x1]
          %v2339 = vlaneseq
          %v2340 = vshrl.u32 %v2339, 7
          %v2341 = vsub.s32 0, %v2340
          %v2342 = vrot.slane %v2337, %v2341
          %v2360 = vunpack.c.l.b16 %v2321
          %v2361 = vunpack.c.l.b16 %v2322
          %v2362 = vunpack.c.l.b16 %v2323
          %v2363 = vunpack.c.l.b16 %v2324
          %v2364 = vunpack.c.l.b16 %v2325
          %v2365 = vunpack.c.l.b16 %v2326
          %v2366 = vunpack.c.l.b16 %v2327
          %v2367 = vunpack.c.l.b16 %v2328
          %v2368 = vunpack.c.l.b16 %v2329
          %v2369 = vunpack.c.l.b16 %v2330
          %v2370 = vunpack.c.l.b16 %v2331
          %v2371 = vunpack.c.l.b16 %v2332
          %v2372 = vunpack.c.l.b16 %v2333
          %v2373 = vunpack.c.l.b16 %v2334
          %v2374 = vunpack.c.l.b16 %v2335
          %v2375 = vunpack.c.l.b16 %v2336
          %v2376 = vpack.c.b16 %v2361, %v2360
          %v2377 = vpack.c.b16 %v2363, %v2362
          %v2378 = vpack.c.b16 %v2365, %v2364
          %v2379 = vpack.c.b16 %v2367, %v2366
          %v2380 = vpack.c.b16 %v2369, %v2368
          %v2381 = vpack.c.b16 %v2371, %v2370
          %v2382 = vpack.c.b16 %v2373, %v2372
          %v2383 = vpack.c.b16 %v2375, %v2374
          %2392 = vmatprep.subr.bf16.mxu0 0
          %2393 = vmatpush1.bf16.msra.mxu0 %v2376
          %2394 = vmatprep.subr.bf16.mxu0 0
          %2395 = vmatpush1.bf16.msra.mxu0 %v2377
          %2396 = vmatprep.subr.bf16.mxu0 0
          %2397 = vmatpush1.bf16.msra.mxu0 %v2378
          %2398 = vmatprep.subr.bf16.mxu0 0
          %2399 = vmatpush1.bf16.msra.mxu0 %v2379
          %2400 = vmatprep.subr.bf16.mxu0 0
          %2401 = vmatpush1.bf16.msra.mxu0 %v2380
          %2402 = vmatprep.subr.bf16.mxu0 0
          %2403 = vmatpush1.bf16.msra.mxu0 %v2381
          %2404 = vmatprep.subr.bf16.mxu0 0
          %2405 = vmatpush1.bf16.msra.mxu0 %v2382
          %2406 = vmatprep.subr.bf16.mxu0 0
          %2407 = vmatpush1.bf16.msra.mxu0 %v2383
          %2408 = vmatprep.subr.bf16.mxu0 0
          %2409 = vmatpush1.bf16.msra.mxu0 0
          %2410 = vmatprep.subr.bf16.mxu0 0
          %2411 = vmatpush1.bf16.msra.mxu0 0
          %2412 = vmatprep.subr.bf16.mxu0 0
          %2413 = vmatpush1.bf16.msra.mxu0 0
          %2414 = vmatprep.subr.bf16.mxu0 0
          %2415 = vmatpush1.bf16.msra.mxu0 0
          %2416 = vmatprep.subr.bf16.mxu0 0
          %2417 = vmatpush1.bf16.msra.mxu0 0
          %2418 = vmatprep.subr.bf16.mxu0 0
          %2419 = vmatpush1.bf16.msra.mxu0 0
          %2420 = vmatprep.subr.bf16.mxu0 0
          %2421 = vmatpush1.bf16.msra.mxu0 0
          %2422 = vmatprep.subr.bf16.mxu0 0
          %2423 = vmatpush1.bf16.msra.mxu0 0
          %2424 = vmatprep.mubr.bf16.mxu0 0
          %2425 = vmatmul.mubr.bf16.gmra.mrb[0].mxu0 %v2320
          %v2426 = vpop.f32.mrb[0].mxu0
          %v2427 = vadd.f32 %v2342, %v2426
          %v2428 = vpop.f32.mrb[0].mxu0
          %v2429 = vpop.f32.mrb[0].mxu0
          %v2430 = vpop.f32.mrb[0].mxu0
          %2431 = vdwg.mxu0
          %vm2432 = vcmp.ge.f32.partialorder %v2427, 0.0
          %v2433 = vmul.f32 %v2427, 0.1
          %v2434 = vsel %vm2432, %v2427, %v2433
          %v2435 = vld [vmem:[%s6] sm:$0x1]
          %v2437 = vlaneseq
          %v2438 = vshrl.u32 %v2437, 7
          %v2439 = vsub.s32 0, %v2438
          %v2440 = vrot.slane %v2435, %v2439
          %v2442 = vmul.f32 %v2434, %v2440
          %vm2443 = vcmask 1041408
          %v2444 = vsel %vm2443, %v2442, 0.0
          %2445 = vadd.xlane.f32.xlu0 %v2444
          %v2446 = vpop.xlane.xlu0 %2445
          %v2447 = vld [vmem:[#allocation4] sm:$0x1]
          %v2449 = vlaneseq
          %v2450 = vshrl.u32 %v2449, 7
          %v2451 = vsub.s32 0, %v2450
          %v2452 = vrot.slane %v2447, %v2451
          %v2454 = vadd.f32 %v2446, %v2452
          %vm2455 = vcmask 1024
          %2456 = vst.msk [vmem:[%s450] sm:$0x3] %vm2455, %v2454
        $region84: #{run_forward.1} parent=51 // pred_fallthru
          _
        %p2457 = scmp.lt.s32.totalorder %s33, 1
        %s2458 = scalar_select %p2457, %s33, 1
        %s2459 = smul.addr %s2458, 2
        %s2460 = scalar_lea.vmem %s8, %s2459
        // Predicated region
        $region85: #{run_forward.1} parent=51 // pred_check
          %p2461 = pneg %p253
        $region86: #{run_forward.1} parent=51 // pred_check_branch
          %2463 = sbr.rel (%p2461) target = $region88
        $region87: #{run_forward.1} parent=51 // pred_region
          _
        $region88: #{run_forward.1} parent=51 // pred_fallthru
          _
      $region52: #{run_forward.1} parent=5 // pred_fallthru
        _
      %p2464 = scmp.le.s32.totalorder 2, %s23
      // Predicated region
      $region89: #{run_forward.1} parent=5 // pred_check
        %p2465 = pneg %p2464
      $region90: #{run_forward.1} parent=5 // pred_check_branch
        %2467 = sbr.rel (%p2465) target = $region92
      $region91: #{run_forward.1} parent=5 // pred_region
        %s2468 = ssub.s32 %s23, 2
        // Predicated region
        $region93: #{run_forward.1} parent=91 // pred_check
          %p2469 = pneg %p259
        $region94: #{run_forward.1} parent=91 // pred_check_branch
          %2471 = sbr.rel (%p2469) target = $region96
        $region95: #{run_forward.1} parent=91 // pred_region
          %p2472 = scmp.lt.s32.totalorder %s36, 1
          %s2473 = scalar_select %p2472, %s36, 1
          %s2474 = smul.addr %s2473, 2
          %s2475 = scalar_lea.vmem %s8, %s2474
        $region96: #{run_forward.1} parent=91 // pred_fallthru
          _
      $region92: #{run_forward.1} parent=5 // pred_fallthru
        _
    $region6: #{run_forward.1} parent=1 // loop_footer
      %s27 = sadd.s32 1, %s23
    $region7: #{run_forward.1} parent=1 // loop_footer_branch
      %22 = sbr.rel target = $region3
    $region8: #{run_forward.1} parent=1 // loop_exit
      _
    %2476 = vsyncpa [#allocation6], 1
    %s2477 = scalar_lea.sflag [#allocation6], 1
    %2478 = vsyncpa %s2477, 1
    %2479 = vsyncpa [#allocation8], 1
    %s2480 = scalar_lea.sflag [#allocation8], 1
    %2481 = vsyncpa %s2480, 1
    %2482 = vsyncpa [#allocation11], 1

</llo_original>
